<compile_context>
chip_gen: v7x
topology: tpu7x:2x2x1
jax: 0.10.0
libtpu: 0.0.40
codegen_flags: <defaults>
</compile_context>

<pallas_src>
import functools

import jax
import jax.numpy as jnp
from jax.experimental import pallas as pl
from jax.experimental.pallas import tpu as pltpu

HIDDEN = 2048
BN_EPS = 1e-5
NORM_EPS = 1e-12  # F.normalize default eps


def _proj_head_kernel(x_ref, w1_ref, c1_ref, w2_ref, c2_ref, o_ref):
    """Grid axis 0 tiles the hidden dimension (default: single step).

    Per step k (hidden block k):
      h_k    = relu( x @ W1'[:, k_blk] + c1[k_blk] )        (BN1 folded in)
      o_ref += h_k @ W2'[k_blk, :]                          (BN2 folded in)
    Last step: add c2, L2-normalize rows, write out.
    """
    k = pl.program_id(0)

    @pl.when(k == 0)
    def _():
        o_ref[...] = jnp.zeros_like(o_ref)

    # Linear1 (+ folded BN1) + ReLU on this hidden block. bf16 operands, f32 acc.
    h = jnp.dot(x_ref[...], w1_ref[...], preferred_element_type=jnp.float32)
    h = jnp.maximum(h + c1_ref[...], 0.0)

    # Linear2 (+ folded BN2) partial sum, accumulated in the f32 output ref.
    o_ref[...] += jnp.dot(h.astype(w2_ref.dtype), w2_ref[...],
                          preferred_element_type=jnp.float32)

    @pl.when(k == pl.num_programs(0) - 1)
    def _():
        z = o_ref[...] + c2_ref[...]
        # F.normalize(dim=-1): x / max(||x||, eps) == x * rsqrt(max(sumsq, eps^2))
        sumsq = jnp.sum(z * z, axis=-1, keepdims=True)
        inv = jax.lax.rsqrt(jnp.maximum(sumsq, NORM_EPS * NORM_EPS))
        o_ref[...] = z * inv


@functools.partial(jax.jit, static_argnames=("tk",))
def proj_head_mini(x, w1, b1, s1, t1, w2, b2, s2, t2, *, tk=HIDDEN):
    B, in_dim = x.shape
    hidden, out_dim = w2.shape
    assert hidden % tk == 0
    grid = (hidden // tk,)  # default: (1,) -> no per-step grid overhead

    # Fold BN into weights/bias once on the host/XLA side.
    w1f = (w1 * s1[None, :]).astype(jnp.bfloat16)      # (in_dim, hidden)
    c1 = (b1 * s1 + t1).reshape(1, -1)                 # (1, hidden) f32
    w2f = (w2 * s2[None, :]).astype(jnp.bfloat16)      # (hidden, out_dim)
    c2 = (b2 * s2 + t2).reshape(1, -1)                 # (1, out_dim) f32
    xb = x.astype(jnp.bfloat16)

    return pl.pallas_call(
        _proj_head_kernel,
        out_shape=jax.ShapeDtypeStruct((B, out_dim), jnp.float32),
        grid_spec=pltpu.PrefetchScalarGridSpec(
            num_scalar_prefetch=0,
            grid=grid,
            in_specs=[
                pl.BlockSpec((B, in_dim), lambda k: (0, 0)),      # x (resident)
                pl.BlockSpec((in_dim, tk), lambda k: (0, k)),     # W1' block
                pl.BlockSpec((1, tk), lambda k: (0, k)),          # c1 block
                pl.BlockSpec((tk, out_dim), lambda k: (k, 0)),    # W2' block
                pl.BlockSpec((1, out_dim), lambda k: (0, 0)),     # c2
            ],
            out_specs=pl.BlockSpec((B, out_dim), lambda k: (0, 0)),
        ),
        compiler_params=pltpu.CompilerParams(
            dimension_semantics=("arbitrary",),
            vmem_limit_bytes=32 * 1024 * 1024),
    )(xb, w1f, c1, w2f, c2)


def _xavier_uniform(key, fan_in, fan_out):
    # Matches nn.init.xavier_uniform_ (gain=1). Returned as (fan_in, fan_out).
    limit = (6.0 / (fan_in + fan_out)) ** 0.5
    return jax.random.uniform(key, (fan_in, fan_out), jnp.float32, -limit, limit)


def _linear_bias(key, fan_in, fan_out):
    # PyTorch Linear default bias init: U(-1/sqrt(fan_in), 1/sqrt(fan_in)).
    bound = 1.0 / (fan_in ** 0.5)
    return jax.random.uniform(key, (fan_out,), jnp.float32, -bound, bound)


def make_params(key, in_dim, out_dim):
    k1, k2, k3, k4 = jax.random.split(key, 4)
    w1 = _xavier_uniform(k1, in_dim, HIDDEN)          # 'xav' init_mode
    b1 = _linear_bias(k2, in_dim, HIDDEN)
    w2 = _xavier_uniform(k3, HIDDEN, out_dim)
    b2 = _linear_bias(k4, HIDDEN, out_dim)

    # BatchNorm1d params at init: gamma=1, beta=0, running_mean=0, running_var=1.
    def bn_fold(num_feat):
        gamma = jnp.ones((num_feat,), jnp.float32)
        beta = jnp.zeros((num_feat,), jnp.float32)
        mean = jnp.zeros((num_feat,), jnp.float32)
        var = jnp.ones((num_feat,), jnp.float32)
        scale = gamma / jnp.sqrt(var + BN_EPS)
        shift = beta - mean * scale
        return scale, shift

    s1, t1 = bn_fold(HIDDEN)
    s2, t2 = bn_fold(out_dim)
    return w1, b1, s1, t1, w2, b2, s2, t2


def reference(x, w1, b1, s1, t1, w2, b2, s2, t2, *, quantize=True):
    """Pure-JAX reference.

    quantize=True mirrors the kernel's bf16 weight/activation quantization
    (for a tight comparison); quantize=False is the exact fp32 module math.
    """
    f32 = jnp.float32
    q = (lambda a: a.astype(jnp.bfloat16).astype(f32)) if quantize else (lambda a: a)
    w1f = q(w1 * s1[None, :])
    c1 = b1 * s1 + t1
    w2f = q(w2 * s2[None, :])
    c2 = b2 * s2 + t2
    h = jnp.maximum(q(x) @ w1f + c1, 0.0)
    z = q(h) @ w2f + c2
    n = jnp.maximum(jnp.linalg.norm(z, axis=-1, keepdims=True), NORM_EPS)
    return z / n


if __name__ == "__main__":
    B, in_dim, out_dim = 8, 32, 128
    key = jax.random.PRNGKey(0)
    kx, kp = jax.random.split(key)
    x = jax.random.normal(kx, (B, in_dim), jnp.float32)
    params = make_params(kp, in_dim, out_dim)

    out = proj_head_mini(x, *params)
    out = jax.block_until_ready(out)

    ref_q = reference(x, *params, quantize=True)    # same bf16 quantization as kernel
    ref_f = reference(x, *params, quantize=False)   # exact fp32 module semantics
    assert out.shape == (B, out_dim)
    assert jnp.allclose(out, ref_q, atol=1e-4, rtol=1e-4), "mismatch vs quantized reference"
    assert jnp.allclose(out, ref_f, atol=2e-2, rtol=2e-2), "mismatch vs fp32 reference"
    print("KERNEL_OK")
</pallas_src>

<mosaic_0001>
module attributes {stable_mosaic.version = 11 : i64} {
  func.func @_proj_head_kernel(%arg0: i32, %arg1: memref<8x32xbf16, #tpu.memory_space<vmem>>, %arg2: memref<32x2048xbf16, #tpu.memory_space<vmem>>, %arg3: memref<1x2048xf32, #tpu.memory_space<vmem>>, %arg4: memref<2048x128xbf16, #tpu.memory_space<vmem>>, %arg5: memref<1x128xf32, #tpu.memory_space<vmem>>, %arg6: memref<8x128xf32, #tpu.memory_space<vmem>>) attributes {dimension_semantics = [#tpu.dimension_semantics<arbitrary>], iteration_bounds = array<i64: 1>, scalar_prefetch = 0 : i64, scratch_operands = 0 : i64, tpu.core_type = #tpu.core_type<tc>, window_params = [{pipeline_mode = #tpu.pipeline_mode<synchronous>, transform_indices = @transform_0, window_bounds = array<i64: 8, 32>}, {transform_indices = @transform_1, window_bounds = array<i64: 32, 2048>}, {transform_indices = @transform_2, window_bounds = array<i64: 1, 2048>}, {transform_indices = @transform_3, window_bounds = array<i64: 2048, 128>}, {pipeline_mode = #tpu.pipeline_mode<synchronous>, transform_indices = @transform_4, window_bounds = array<i64: 1, 128>}, {pipeline_mode = #tpu.pipeline_mode<synchronous>, transform_indices = @transform_5, window_bounds = array<i64: 8, 128>}]} {
    %c0_i32 = arith.constant 0 : i32
    %0 = arith.cmpi eq, %arg0, %c0_i32 : i32
    %1 = arith.extui %0 : i1 to i32
    %c0_i32_0 = arith.constant 0 : i32
    %2 = arith.cmpi ne, %1, %c0_i32_0 : i32
    scf.if %2 {
      %cst_16 = arith.constant 0.000000e+00 : f32
      %20 = vector.broadcast %cst_16 : f32 to vector<8x128xf32>
      %c0_17 = arith.constant 0 : index
      %c0_18 = arith.constant 0 : index
      %21 = vector.load %arg6[%c0_17, %c0_18] : memref<8x128xf32, #tpu.memory_space<vmem>>, vector<8x128xf32>
      tpu.vector_store %arg6[%c0_17, %c0_18], %20 {strides = array<i32>} : memref<8x128xf32, #tpu.memory_space<vmem>>, vector<8x128xf32>,
    } else {
    }
    %c0 = arith.constant 0 : index
    %c0_1 = arith.constant 0 : index
    %3 = vector.load %arg1[%c0, %c0_1] : memref<8x32xbf16, #tpu.memory_space<vmem>>, vector<8x32xbf16>
    %c0_2 = arith.constant 0 : index
    %c0_3 = arith.constant 0 : index
    %4 = vector.load %arg2[%c0_2, %c0_3] : memref<32x2048xbf16, #tpu.memory_space<vmem>>, vector<32x2048xbf16>
    %cst = arith.constant dense<0.000000e+00> : vector<8x2048xf32>
    %5 = tpu.matmul %3, %4, %cst {dimension_numbers = #tpu.dot_dimension_numbers<[1], [0], [0], [1], [0, 0, 1, 1], [], []>} : vector<8x32xbf16>, vector<32x2048xbf16>, vector<8x2048xf32> -> vector<8x2048xf32>
    %c0_4 = arith.constant 0 : index
    %c0_5 = arith.constant 0 : index
    %6 = vector.load %arg3[%c0_4, %c0_5] : memref<1x2048xf32, #tpu.memory_space<vmem>>, vector<1x2048xf32>
    %7 = vector.broadcast %6 : vector<1x2048xf32> to vector<8x2048xf32>
    %8 = arith.addf %5, %7 : vector<8x2048xf32>
    %cst_6 = arith.constant 0.000000e+00 : f32
    %9 = vector.broadcast %cst_6 : f32 to vector<8x2048xf32>
    %10 = arith.maximumf %8, %9 : vector<8x2048xf32>
    %c0_7 = arith.constant 0 : index
    %c0_8 = arith.constant 0 : index
    %11 = vector.load %arg6[%c0_7, %c0_8] : memref<8x128xf32, #tpu.memory_space<vmem>>, vector<8x128xf32>
    %12 = arith.truncf %10 : vector<8x2048xf32> to vector<8x2048xbf16>
    %c0_9 = arith.constant 0 : index
    %c0_10 = arith.constant 0 : index
    %13 = vector.load %arg4[%c0_9, %c0_10] : memref<2048x128xbf16, #tpu.memory_space<vmem>>, vector<2048x128xbf16>
    %cst_11 = arith.constant dense<0.000000e+00> : vector<8x128xf32>
    %14 = tpu.matmul %12, %13, %cst_11 {dimension_numbers = #tpu.dot_dimension_numbers<[1], [0], [0], [1], [0, 0, 1, 1], [], []>} : vector<8x2048xbf16>, vector<2048x128xbf16>, vector<8x128xf32> -> vector<8x128xf32>
    %15 = arith.addf %11, %14 : vector<8x128xf32>
    %c0_12 = arith.constant 0 : index
    %c0_13 = arith.constant 0 : index
    %16 = vector.load %arg6[%c0_12, %c0_13] : memref<8x128xf32, #tpu.memory_space<vmem>>, vector<8x128xf32>
    tpu.vector_store %arg6[%c0_12, %c0_13], %15 {strides = array<i32>} : memref<8x128xf32, #tpu.memory_space<vmem>>, vector<8x128xf32>,
    %c0_i32_14 = arith.constant 0 : i32
    %17 = arith.cmpi eq, %arg0, %c0_i32_14 : i32
    %18 = arith.extui %17 : i1 to i32
    %c0_i32_15 = arith.constant 0 : i32
    %19 = arith.cmpi ne, %18, %c0_i32_15 : i32
    scf.if %19 {
      %c0_16 = arith.constant 0 : index
      %c0_17 = arith.constant 0 : index
      %20 = vector.load %arg6[%c0_16, %c0_17] : memref<8x128xf32, #tpu.memory_space<vmem>>, vector<8x128xf32>
      %c0_18 = arith.constant 0 : index
      %c0_19 = arith.constant 0 : index
      %21 = vector.load %arg5[%c0_18, %c0_19] : memref<1x128xf32, #tpu.memory_space<vmem>>, vector<1x128xf32>
      %22 = vector.broadcast %21 : vector<1x128xf32> to vector<8x128xf32>
      %23 = arith.addf %20, %22 : vector<8x128xf32>
      %24 = arith.mulf %23, %23 : vector<8x128xf32>
      %cst_20 = arith.constant dense<0.000000e+00> : vector<8xf32>
      %25 = vector.multi_reduction <add>, %24, %cst_20 [1] : vector<8x128xf32> to vector<8xf32>
      %26 = vector.shape_cast %25 : vector<8xf32> to vector<8x1xf32>
      %cst_21 = arith.constant 1.000000e-24 : f32
      %27 = vector.broadcast %cst_21 : f32 to vector<8x1xf32>
      %28 = arith.maximumf %26, %27 : vector<8x1xf32>
      %29 = math.rsqrt %28 : vector<8x1xf32>
      %30 = vector.broadcast %29 : vector<8x1xf32> to vector<8x128xf32>
      %31 = arith.mulf %23, %30 : vector<8x128xf32>
      %c0_22 = arith.constant 0 : index
      %c0_23 = arith.constant 0 : index
      %32 = vector.load %arg6[%c0_22, %c0_23] : memref<8x128xf32, #tpu.memory_space<vmem>>, vector<8x128xf32>
      tpu.vector_store %arg6[%c0_22, %c0_23], %31 {strides = array<i32>} : memref<8x128xf32, #tpu.memory_space<vmem>>, vector<8x128xf32>,
    } else {
    }
    return
  }
  func.func @transform_0(%arg0: i32) -> (i32, i32) {
    %c0_i32 = arith.constant 0 : i32
    %c0_i32_0 = arith.constant 0 : i32
    %c0_i32_1 = arith.constant 0 : i32
    return %c0_i32, %c0_i32_0 : i32, i32
  }
  func.func @transform_1(%arg0: i32) -> (i32, i32) {
    %c0_i32 = arith.constant 0 : i32
    %c0_i32_0 = arith.constant 0 : i32
    return %c0_i32, %arg0 : i32, i32
  }
  func.func @transform_2(%arg0: i32) -> (i32, i32) {
    %c0_i32 = arith.constant 0 : i32
    %c0_i32_0 = arith.constant 0 : i32
    return %c0_i32, %arg0 : i32, i32
  }
  func.func @transform_3(%arg0: i32) -> (i32, i32) {
    %c0_i32 = arith.constant 0 : i32
    %c0_i32_0 = arith.constant 0 : i32
    return %arg0, %c0_i32 : i32, i32
  }
  func.func @transform_4(%arg0: i32) -> (i32, i32) {
    %c0_i32 = arith.constant 0 : i32
    %c0_i32_0 = arith.constant 0 : i32
    %c0_i32_1 = arith.constant 0 : i32
    return %c0_i32, %c0_i32_0 : i32, i32
  }
  func.func @transform_5(%arg0: i32) -> (i32, i32) {
    %c0_i32 = arith.constant 0 : i32
    %c0_i32_0 = arith.constant 0 : i32
    %c0_i32_1 = arith.constant 0 : i32
    return %c0_i32, %c0_i32_0 : i32, i32
  }
}

</mosaic_0001>

<llo_original>
// kernel: proj_head_mini.1
$region0: #{proj_head_mini.1}
  #allocation0 [shape = 'u32[]', space=smem, size = 0x4, offset = 0x4, fixed_abs, tag = 'smem constant byte address 0x4 - core index']
  #allocation1 [shape = 'u32[144,128]{1,0:T(1,128)}', space=vmem, size = 0x12000, scoped, tag = 'internal scratch']
  %s0 = inlined_call_operand.vmem [shape: bf16[8,32], index: 0, kind: input, shape index: {}]
  %s1 = inlined_call_operand.vmem [shape: bf16[32,2048], index: 1, kind: input, shape index: {}]
  %s2 = inlined_call_operand.vmem [shape: f32[1,2048], index: 2, kind: input, shape index: {}]
  %s3 = inlined_call_operand.vmem [shape: bf16[2048,128], index: 3, kind: input, shape index: {}]
  %s4 = inlined_call_operand.vmem [shape: f32[1,128], index: 4, kind: input, shape index: {}]
  %s5 = inlined_call_operand.hbm [shape: f32[8,128], index: 5, kind: output, shape index: {}]
  %s6 = sld [smem:[#allocation0]]
  $region38: #{proj_head_mini.1} parent=0
    _
  %s8 = ssub.s32 1, %s6
  %s9 = scalar_select 0, %s8, %s6
  $region1: #{proj_head_mini.1} parent=0
    #allocation2 [shape = 'u8[4096]{0}', space=vmem, size = 0x1000, scoped, tag = 'output window, operand 0, single buffered']
    #allocation3 [shape = 's32[1]{0}', space=sflag, size = 0x4, scoped, tag = 'scoped memory for proj_head_mini.1']
    %10 = vsyncpa [#allocation3], 0
    // Predicated region
    $region2: #{proj_head_mini.1} parent=1 // pred_check
      _
    $region3: #{proj_head_mini.1} parent=1 // pred_check_branch
      %12 = sbr.rel (0) target = $region5
    $region4: #{proj_head_mini.1} parent=1 // pred_region
      _
    $region5: #{proj_head_mini.1} parent=1 // pred_fallthru
      _
    // Predicated region
    $region6: #{proj_head_mini.1} parent=1 // pred_check
      _
    $region7: #{proj_head_mini.1} parent=1 // pred_check_branch
      %14 = sbr.rel (0) target = $region9
    $region8: #{proj_head_mini.1} parent=1 // pred_region
      _
    $region9: #{proj_head_mini.1} parent=1 // pred_fallthru
      _
    // Predicated region
    $region10: #{proj_head_mini.1} parent=1 // pred_check
      _
    $region11: #{proj_head_mini.1} parent=1 // pred_check_branch
      %16 = sbr.rel (0) target = $region13
    $region12: #{proj_head_mini.1} parent=1 // pred_region
      _
    $region13: #{proj_head_mini.1} parent=1 // pred_fallthru
      _
    // Predicated region
    $region14: #{proj_head_mini.1} parent=1 // pred_check
      _
    $region15: #{proj_head_mini.1} parent=1 // pred_check_branch
      %18 = sbr.rel (0) target = $region17
    $region16: #{proj_head_mini.1} parent=1 // pred_region
      _
    $region17: #{proj_head_mini.1} parent=1 // pred_fallthru
      _
    // Predicated region
    $region18: #{proj_head_mini.1} parent=1 // pred_check
      _
    $region19: #{proj_head_mini.1} parent=1 // pred_check_branch
      %20 = sbr.rel (0) target = $region21
    $region20: #{proj_head_mini.1} parent=1 // pred_region
      _
    $region21: #{proj_head_mini.1} parent=1 // pred_fallthru
      _
    %p22 = scmp.eq.s32.totalorder 0, 0
    // Predicated region
    $region22: #{proj_head_mini.1} parent=1 // pred_check
      %p23 = pneg %p22
    $region23: #{proj_head_mini.1} parent=1 // pred_check_branch
      %25 = sbr.rel (%p23) target = $region25
    $region24: #{proj_head_mini.1} parent=1 // pred_region
      %26 = vst [vmem:[#allocation2] sm:$0xff] 0.0
    $region25: #{proj_head_mini.1} parent=1 // pred_fallthru
      _
    %v27 = vld [vmem:[%s0] sm:$0xf]
    %v28 = vld [vmem:[%s1] sm:$0xff]
    %v29 = vld [vmem:[%s1 + $0x8] sm:$0xff]
    %v30 = vld [vmem:[%s1 + $0x10] sm:$0xff]
    %v31 = vld [vmem:[%s1 + $0x18] sm:$0xff]
    %v32 = vld [vmem:[%s1 + $0x20] sm:$0xff]
    %v33 = vld [vmem:[%s1 + $0x28] sm:$0xff]
    %v34 = vld [vmem:[%s1 + $0x30] sm:$0xff]
    %v35 = vld [vmem:[%s1 + $0x38] sm:$0xff]
    %v36 = vld [vmem:[%s1 + $0x40] sm:$0xff]
    %v37 = vld [vmem:[%s1 + $0x48] sm:$0xff]
    %v38 = vld [vmem:[%s1 + $0x50] sm:$0xff]
    %v39 = vld [vmem:[%s1 + $0x58] sm:$0xff]
    %v40 = vld [vmem:[%s1 + $0x60] sm:$0xff]
    %v41 = vld [vmem:[%s1 + $0x68] sm:$0xff]
    %v42 = vld [vmem:[%s1 + $0x70] sm:$0xff]
    %v43 = vld [vmem:[%s1 + $0x78] sm:$0xff]
    %v44 = vld [vmem:[%s1 + $0x80] sm:$0xff]
    %v45 = vld [vmem:[%s1 + $0x88] sm:$0xff]
    %v46 = vld [vmem:[%s1 + $0x90] sm:$0xff]
    %v47 = vld [vmem:[%s1 + $0x98] sm:$0xff]
    %v48 = vld [vmem:[%s1 + $0xa0] sm:$0xff]
    %v49 = vld [vmem:[%s1 + $0xa8] sm:$0xff]
    %v50 = vld [vmem:[%s1 + $0xb0] sm:$0xff]
    %v51 = vld [vmem:[%s1 + $0xb8] sm:$0xff]
    %v52 = vld [vmem:[%s1 + $0xc0] sm:$0xff]
    %v53 = vld [vmem:[%s1 + $0xc8] sm:$0xff]
    %v54 = vld [vmem:[%s1 + $0xd0] sm:$0xff]
    %v55 = vld [vmem:[%s1 + $0xd8] sm:$0xff]
    %v56 = vld [vmem:[%s1 + $0xe0] sm:$0xff]
    %v57 = vld [vmem:[%s1 + $0xe8] sm:$0xff]
    %v58 = vld [vmem:[%s1 + $0xf0] sm:$0xff]
    %v59 = vld [vmem:[%s1 + $0xf8] sm:$0xff]
    %v60 = vld [vmem:[%s2] sm:$0xff]
    %v61 = vld [vmem:[%s2 + $0x8] sm:$0xff]
    %v64 = vlaneseq
    %v65 = vshrl.u32 %v64, 7
    %v66 = vsub.s32 0, %v65
    %v67 = vrot.slane %v60, %v66
    %v68 = vlaneseq
    %v69 = vshrl.u32 %v68, 7
    %v70 = vsub.s32 1, %v69
    %v71 = vrot.slane %v60, %v70
    %v72 = vlaneseq
    %v73 = vshrl.u32 %v72, 7
    %v74 = vsub.s32 2, %v73
    %v75 = vrot.slane %v60, %v74
    %v76 = vlaneseq
    %v77 = vshrl.u32 %v76, 7
    %v78 = vsub.s32 3, %v77
    %v79 = vrot.slane %v60, %v78
    %v80 = vlaneseq
    %v81 = vshrl.u32 %v80, 7
    %v82 = vsub.s32 4, %v81
    %v83 = vrot.slane %v60, %v82
    %v84 = vlaneseq
    %v85 = vshrl.u32 %v84, 7
    %v86 = vsub.s32 5, %v85
    %v87 = vrot.slane %v60, %v86
    %v88 = vlaneseq
    %v89 = vshrl.u32 %v88, 7
    %v90 = vsub.s32 6, %v89
    %v91 = vrot.slane %v60, %v90
    %v92 = vlaneseq
    %v93 = vshrl.u32 %v92, 7
    %v94 = vsub.s32 7, %v93
    %v95 = vrot.slane %v60, %v94
    %v96 = vlaneseq
    %v97 = vshrl.u32 %v96, 7
    %v98 = vsub.s32 0, %v97
    %v99 = vrot.slane %v61, %v98
    %v100 = vlaneseq
    %v101 = vshrl.u32 %v100, 7
    %v102 = vsub.s32 1, %v101
    %v103 = vrot.slane %v61, %v102
    %v104 = vlaneseq
    %v105 = vshrl.u32 %v104, 7
    %v106 = vsub.s32 2, %v105
    %v107 = vrot.slane %v61, %v106
    %v108 = vlaneseq
    %v109 = vshrl.u32 %v108, 7
    %v110 = vsub.s32 3, %v109
    %v111 = vrot.slane %v61, %v110
    %v112 = vlaneseq
    %v113 = vshrl.u32 %v112, 7
    %v114 = vsub.s32 4, %v113
    %v115 = vrot.slane %v61, %v114
    %v116 = vlaneseq
    %v117 = vshrl.u32 %v116, 7
    %v118 = vsub.s32 5, %v117
    %v119 = vrot.slane %v61, %v118
    %v120 = vlaneseq
    %v121 = vshrl.u32 %v120, 7
    %v122 = vsub.s32 6, %v121
    %v123 = vrot.slane %v61, %v122
    %v124 = vlaneseq
    %v125 = vshrl.u32 %v124, 7
    %v126 = vsub.s32 7, %v125
    %v127 = vrot.slane %v61, %v126
    %v176 = vunpack.c.l.b16 %v28
    %v177 = vunpack.c.h.b16 %v28
    %v178 = vunpack.c.l.b16 %v29
    %v179 = vunpack.c.h.b16 %v29
    %v180 = vunpack.c.l.b16 %v30
    %v181 = vunpack.c.h.b16 %v30
    %v182 = vunpack.c.l.b16 %v31
    %v183 = vunpack.c.h.b16 %v31
    %v184 = vunpack.c.l.b16 %v32
    %v185 = vunpack.c.h.b16 %v32
    %v186 = vunpack.c.l.b16 %v33
    %v187 = vunpack.c.h.b16 %v33
    %v188 = vunpack.c.l.b16 %v34
    %v189 = vunpack.c.h.b16 %v34
    %v190 = vunpack.c.l.b16 %v35
    %v191 = vunpack.c.h.b16 %v35
    %v192 = vunpack.c.l.b16 %v36
    %v193 = vunpack.c.h.b16 %v36
    %v194 = vunpack.c.l.b16 %v37
    %v195 = vunpack.c.h.b16 %v37
    %v196 = vunpack.c.l.b16 %v38
    %v197 = vunpack.c.h.b16 %v38
    %v198 = vunpack.c.l.b16 %v39
    %v199 = vunpack.c.h.b16 %v39
    %v200 = vunpack.c.l.b16 %v40
    %v201 = vunpack.c.h.b16 %v40
    %v202 = vunpack.c.l.b16 %v41
    %v203 = vunpack.c.h.b16 %v41
    %v204 = vunpack.c.l.b16 %v42
    %v205 = vunpack.c.h.b16 %v42
    %v206 = vunpack.c.l.b16 %v43
    %v207 = vunpack.c.h.b16 %v43
    %v208 = vunpack.c.l.b16 %v44
    %v209 = vunpack.c.h.b16 %v44
    %v210 = vunpack.c.l.b16 %v45
    %v211 = vunpack.c.h.b16 %v45
    %v212 = vunpack.c.l.b16 %v46
    %v213 = vunpack.c.h.b16 %v46
    %v214 = vunpack.c.l.b16 %v47
    %v215 = vunpack.c.h.b16 %v47
    %v216 = vunpack.c.l.b16 %v48
    %v217 = vunpack.c.h.b16 %v48
    %v218 = vunpack.c.l.b16 %v49
    %v219 = vunpack.c.h.b16 %v49
    %v220 = vunpack.c.l.b16 %v50
    %v221 = vunpack.c.h.b16 %v50
    %v222 = vunpack.c.l.b16 %v51
    %v223 = vunpack.c.h.b16 %v51
    %v224 = vunpack.c.l.b16 %v52
    %v225 = vunpack.c.h.b16 %v52
    %v226 = vunpack.c.l.b16 %v53
    %v227 = vunpack.c.h.b16 %v53
    %v228 = vunpack.c.l.b16 %v54
    %v229 = vunpack.c.h.b16 %v54
    %v230 = vunpack.c.l.b16 %v55
    %v231 = vunpack.c.h.b16 %v55
    %v232 = vunpack.c.l.b16 %v56
    %v233 = vunpack.c.h.b16 %v56
    %v234 = vunpack.c.l.b16 %v57
    %v235 = vunpack.c.h.b16 %v57
    %v236 = vunpack.c.l.b16 %v58
    %v237 = vunpack.c.h.b16 %v58
    %v238 = vunpack.c.l.b16 %v59
    %v239 = vunpack.c.h.b16 %v59
    %v240 = vpack.c.b16 %v192, %v176
    %v241 = vpack.c.b16 %v193, %v177
    %v242 = vpack.c.b16 %v194, %v178
    %v243 = vpack.c.b16 %v195, %v179
    %v244 = vpack.c.b16 %v196, %v180
    %v245 = vpack.c.b16 %v197, %v181
    %v246 = vpack.c.b16 %v198, %v182
    %v247 = vpack.c.b16 %v199, %v183
    %v248 = vpack.c.b16 %v200, %v184
    %v249 = vpack.c.b16 %v201, %v185
    %v250 = vpack.c.b16 %v202, %v186
    %v251 = vpack.c.b16 %v203, %v187
    %v252 = vpack.c.b16 %v204, %v188
    %v253 = vpack.c.b16 %v205, %v189
    %v254 = vpack.c.b16 %v206, %v190
    %v255 = vpack.c.b16 %v207, %v191
    %v256 = vpack.c.b16 %v224, %v208
    %v257 = vpack.c.b16 %v225, %v209
    %v258 = vpack.c.b16 %v226, %v210
    %v259 = vpack.c.b16 %v227, %v211
    %v260 = vpack.c.b16 %v228, %v212
    %v261 = vpack.c.b16 %v229, %v213
    %v262 = vpack.c.b16 %v230, %v214
    %v263 = vpack.c.b16 %v231, %v215
    %v264 = vpack.c.b16 %v232, %v216
    %v265 = vpack.c.b16 %v233, %v217
    %v266 = vpack.c.b16 %v234, %v218
    %v267 = vpack.c.b16 %v235, %v219
    %v268 = vpack.c.b16 %v236, %v220
    %v269 = vpack.c.b16 %v237, %v221
    %v270 = vpack.c.b16 %v238, %v222
    %v271 = vpack.c.b16 %v239, %v223
    %vm304 = vcmask 261120
    %v306 = vsel %vm304, %v27, 0
    %308 = vmatprep.subr.bf16.mxu0 %v241
    %309 = vmatpush1.bf16.msra.mxu0 %v240
    %310 = vmatprep.subr.bf16.mxu0 %v257
    %311 = vmatpush1.bf16.msra.mxu0 %v256
    %312 = vmatprep.subr.bf16.mxu0 0
    %313 = vmatpush1.bf16.msra.mxu0 0
    %314 = vmatprep.subr.bf16.mxu0 0
    %315 = vmatpush1.bf16.msra.mxu0 0
    %316 = vmatprep.subr.bf16.mxu0 0
    %317 = vmatpush1.bf16.msra.mxu0 0
    %318 = vmatprep.subr.bf16.mxu0 0
    %319 = vmatpush1.bf16.msra.mxu0 0
    %320 = vmatprep.subr.bf16.mxu0 0
    %321 = vmatpush1.bf16.msra.mxu0 0
    %322 = vmatprep.subr.bf16.mxu0 0
    %323 = vmatpush1.bf16.msra.mxu0 0
    %324 = vmatprep.subr.bf16.mxu0 0
    %325 = vmatpush1.bf16.msra.mxu0 0
    %326 = vmatprep.subr.bf16.mxu0 0
    %327 = vmatpush1.bf16.msra.mxu0 0
    %328 = vmatprep.subr.bf16.mxu0 0
    %329 = vmatpush1.bf16.msra.mxu0 0
    %330 = vmatprep.subr.bf16.mxu0 0
    %331 = vmatpush1.bf16.msra.mxu0 0
    %332 = vmatprep.subr.bf16.mxu0 0
    %333 = vmatpush1.bf16.msra.mxu0 0
    %334 = vmatprep.subr.bf16.mxu0 0
    %335 = vmatpush1.bf16.msra.mxu0 0
    %336 = vmatprep.subr.bf16.mxu0 0
    %337 = vmatpush1.bf16.msra.mxu0 0
    %338 = vmatprep.subr.bf16.mxu0 0
    %339 = vmatpush1.bf16.msra.mxu0 0
    %340 = vmatprep.mubr.bf16.mxu0 0
    %341 = vmatmul.mubr.bf16.gmra.mrb[0].mxu0 %v306
    %v342 = vpop.f32.mrb[0].mxu0
    %v343 = vadd.f32 %v67, %v342
    %v344 = vpop.f32.mrb[0].mxu0
    %v345 = vadd.f32 %v71, %v344
    %v346 = vpop.f32.mrb[0].mxu0
    %v347 = vpop.f32.mrb[0].mxu0
    %348 = vdwg.mxu0
    %349 = vmatprep.subr.bf16.mxu0 %v243
    %350 = vmatpush1.bf16.msra.mxu0 %v242
    %351 = vmatprep.subr.bf16.mxu0 %v259
    %352 = vmatpush1.bf16.msra.mxu0 %v258
    %353 = vmatprep.subr.bf16.mxu0 0
    %354 = vmatpush1.bf16.msra.mxu0 0
    %355 = vmatprep.subr.bf16.mxu0 0
    %356 = vmatpush1.bf16.msra.mxu0 0
    %357 = vmatprep.subr.bf16.mxu0 0
    %358 = vmatpush1.bf16.msra.mxu0 0
    %359 = vmatprep.subr.bf16.mxu0 0
    %360 = vmatpush1.bf16.msra.mxu0 0
    %361 = vmatprep.subr.bf16.mxu0 0
    %362 = vmatpush1.bf16.msra.mxu0 0
    %363 = vmatprep.subr.bf16.mxu0 0
    %364 = vmatpush1.bf16.msra.mxu0 0
    %365 = vmatprep.subr.bf16.mxu0 0
    %366 = vmatpush1.bf16.msra.mxu0 0
    %367 = vmatprep.subr.bf16.mxu0 0
    %368 = vmatpush1.bf16.msra.mxu0 0
    %369 = vmatprep.subr.bf16.mxu0 0
    %370 = vmatpush1.bf16.msra.mxu0 0
    %371 = vmatprep.subr.bf16.mxu0 0
    %372 = vmatpush1.bf16.msra.mxu0 0
    %373 = vmatprep.subr.bf16.mxu0 0
    %374 = vmatpush1.bf16.msra.mxu0 0
    %375 = vmatprep.subr.bf16.mxu0 0
    %376 = vmatpush1.bf16.msra.mxu0 0
    %377 = vmatprep.subr.bf16.mxu0 0
    %378 = vmatpush1.bf16.msra.mxu0 0
    %379 = vmatprep.subr.bf16.mxu0 0
    %380 = vmatpush1.bf16.msra.mxu0 0
    %381 = vmatprep.mubr.bf16.mxu0 0
    %382 = vmatmul.mubr.bf16.gmra.mrb[0].mxu0 %v306
    %v383 = vpop.f32.mrb[0].mxu0
    %v384 = vadd.f32 %v75, %v383
    %v385 = vpop.f32.mrb[0].mxu0
    %v386 = vadd.f32 %v79, %v385
    %v387 = vpop.f32.mrb[0].mxu0
    %v388 = vpop.f32.mrb[0].mxu0
    %389 = vdwg.mxu0
    %390 = vmatprep.subr.bf16.mxu0 %v245
    %391 = vmatpush1.bf16.msra.mxu0 %v244
    %392 = vmatprep.subr.bf16.mxu0 %v261
    %393 = vmatpush1.bf16.msra.mxu0 %v260
    %394 = vmatprep.subr.bf16.mxu0 0
    %395 = vmatpush1.bf16.msra.mxu0 0
    %396 = vmatprep.subr.bf16.mxu0 0
    %397 = vmatpush1.bf16.msra.mxu0 0
    %398 = vmatprep.subr.bf16.mxu0 0
    %399 = vmatpush1.bf16.msra.mxu0 0
    %400 = vmatprep.subr.bf16.mxu0 0
    %401 = vmatpush1.bf16.msra.mxu0 0
    %402 = vmatprep.subr.bf16.mxu0 0
    %403 = vmatpush1.bf16.msra.mxu0 0
    %404 = vmatprep.subr.bf16.mxu0 0
    %405 = vmatpush1.bf16.msra.mxu0 0
    %406 = vmatprep.subr.bf16.mxu0 0
    %407 = vmatpush1.bf16.msra.mxu0 0
    %408 = vmatprep.subr.bf16.mxu0 0
    %409 = vmatpush1.bf16.msra.mxu0 0
    %410 = vmatprep.subr.bf16.mxu0 0
    %411 = vmatpush1.bf16.msra.mxu0 0
    %412 = vmatprep.subr.bf16.mxu0 0
    %413 = vmatpush1.bf16.msra.mxu0 0
    %414 = vmatprep.subr.bf16.mxu0 0
    %415 = vmatpush1.bf16.msra.mxu0 0
    %416 = vmatprep.subr.bf16.mxu0 0
    %417 = vmatpush1.bf16.msra.mxu0 0
    %418 = vmatprep.subr.bf16.mxu0 0
    %419 = vmatpush1.bf16.msra.mxu0 0
    %420 = vmatprep.subr.bf16.mxu0 0
    %421 = vmatpush1.bf16.msra.mxu0 0
    %422 = vmatprep.mubr.bf16.mxu0 0
    %423 = vmatmul.mubr.bf16.gmra.mrb[0].mxu0 %v306
    %v424 = vpop.f32.mrb[0].mxu0
    %v425 = vadd.f32 %v83, %v424
    %v426 = vpop.f32.mrb[0].mxu0
    %v427 = vadd.f32 %v87, %v426
    %v428 = vpop.f32.mrb[0].mxu0
    %v429 = vpop.f32.mrb[0].mxu0
    %430 = vdwg.mxu0
    %431 = vmatprep.subr.bf16.mxu0 %v247
    %432 = vmatpush1.bf16.msra.mxu0 %v246
    %433 = vmatprep.subr.bf16.mxu0 %v263
    %434 = vmatpush1.bf16.msra.mxu0 %v262
    %435 = vmatprep.subr.bf16.mxu0 0
    %436 = vmatpush1.bf16.msra.mxu0 0
    %437 = vmatprep.subr.bf16.mxu0 0
    %438 = vmatpush1.bf16.msra.mxu0 0
    %439 = vmatprep.subr.bf16.mxu0 0
    %440 = vmatpush1.bf16.msra.mxu0 0
    %441 = vmatprep.subr.bf16.mxu0 0
    %442 = vmatpush1.bf16.msra.mxu0 0
    %443 = vmatprep.subr.bf16.mxu0 0
    %444 = vmatpush1.bf16.msra.mxu0 0
    %445 = vmatprep.subr.bf16.mxu0 0
    %446 = vmatpush1.bf16.msra.mxu0 0
    %447 = vmatprep.subr.bf16.mxu0 0
    %448 = vmatpush1.bf16.msra.mxu0 0
    %449 = vmatprep.subr.bf16.mxu0 0
    %450 = vmatpush1.bf16.msra.mxu0 0
    %451 = vmatprep.subr.bf16.mxu0 0
    %452 = vmatpush1.bf16.msra.mxu0 0
    %453 = vmatprep.subr.bf16.mxu0 0
    %454 = vmatpush1.bf16.msra.mxu0 0
    %455 = vmatprep.subr.bf16.mxu0 0
    %456 = vmatpush1.bf16.msra.mxu0 0
    %457 = vmatprep.subr.bf16.mxu0 0
    %458 = vmatpush1.bf16.msra.mxu0 0
    %459 = vmatprep.subr.bf16.mxu0 0
    %460 = vmatpush1.bf16.msra.mxu0 0
    %461 = vmatprep.subr.bf16.mxu0 0
    %462 = vmatpush1.bf16.msra.mxu0 0
    %463 = vmatprep.mubr.bf16.mxu0 0
    %464 = vmatmul.mubr.bf16.gmra.mrb[0].mxu0 %v306
    %v465 = vpop.f32.mrb[0].mxu0
    %v466 = vadd.f32 %v91, %v465
    %v467 = vpop.f32.mrb[0].mxu0
    %v468 = vadd.f32 %v95, %v467
    %v469 = vpop.f32.mrb[0].mxu0
    %v470 = vpop.f32.mrb[0].mxu0
    %471 = vdwg.mxu0
    %472 = vmatprep.subr.bf16.mxu0 %v249
    %473 = vmatpush1.bf16.msra.mxu0 %v248
    %474 = vmatprep.subr.bf16.mxu0 %v265
    %475 = vmatpush1.bf16.msra.mxu0 %v264
    %476 = vmatprep.subr.bf16.mxu0 0
    %477 = vmatpush1.bf16.msra.mxu0 0
    %478 = vmatprep.subr.bf16.mxu0 0
    %479 = vmatpush1.bf16.msra.mxu0 0
    %480 = vmatprep.subr.bf16.mxu0 0
    %481 = vmatpush1.bf16.msra.mxu0 0
    %482 = vmatprep.subr.bf16.mxu0 0
    %483 = vmatpush1.bf16.msra.mxu0 0
    %484 = vmatprep.subr.bf16.mxu0 0
    %485 = vmatpush1.bf16.msra.mxu0 0
    %486 = vmatprep.subr.bf16.mxu0 0
    %487 = vmatpush1.bf16.msra.mxu0 0
    %488 = vmatprep.subr.bf16.mxu0 0
    %489 = vmatpush1.bf16.msra.mxu0 0
    %490 = vmatprep.subr.bf16.mxu0 0
    %491 = vmatpush1.bf16.msra.mxu0 0
    %492 = vmatprep.subr.bf16.mxu0 0
    %493 = vmatpush1.bf16.msra.mxu0 0
    %494 = vmatprep.subr.bf16.mxu0 0
    %495 = vmatpush1.bf16.msra.mxu0 0
    %496 = vmatprep.subr.bf16.mxu0 0
    %497 = vmatpush1.bf16.msra.mxu0 0
    %498 = vmatprep.subr.bf16.mxu0 0
    %499 = vmatpush1.bf16.msra.mxu0 0
    %500 = vmatprep.subr.bf16.mxu0 0
    %501 = vmatpush1.bf16.msra.mxu0 0
    %502 = vmatprep.subr.bf16.mxu0 0
    %503 = vmatpush1.bf16.msra.mxu0 0
    %504 = vmatprep.mubr.bf16.mxu0 0
    %505 = vmatmul.mubr.bf16.gmra.mrb[0].mxu0 %v306
    %v506 = vpop.f32.mrb[0].mxu0
    %v507 = vadd.f32 %v99, %v506
    %v508 = vpop.f32.mrb[0].mxu0
    %v509 = vadd.f32 %v103, %v508
    %v510 = vpop.f32.mrb[0].mxu0
    %v511 = vpop.f32.mrb[0].mxu0
    %512 = vdwg.mxu0
    %513 = vmatprep.subr.bf16.mxu0 %v251
    %514 = vmatpush1.bf16.msra.mxu0 %v250
    %515 = vmatprep.subr.bf16.mxu0 %v267
    %516 = vmatpush1.bf16.msra.mxu0 %v266
    %517 = vmatprep.subr.bf16.mxu0 0
    %518 = vmatpush1.bf16.msra.mxu0 0
    %519 = vmatprep.subr.bf16.mxu0 0
    %520 = vmatpush1.bf16.msra.mxu0 0
    %521 = vmatprep.subr.bf16.mxu0 0
    %522 = vmatpush1.bf16.msra.mxu0 0
    %523 = vmatprep.subr.bf16.mxu0 0
    %524 = vmatpush1.bf16.msra.mxu0 0
    %525 = vmatprep.subr.bf16.mxu0 0
    %526 = vmatpush1.bf16.msra.mxu0 0
    %527 = vmatprep.subr.bf16.mxu0 0
    %528 = vmatpush1.bf16.msra.mxu0 0
    %529 = vmatprep.subr.bf16.mxu0 0
    %530 = vmatpush1.bf16.msra.mxu0 0
    %531 = vmatprep.subr.bf16.mxu0 0
    %532 = vmatpush1.bf16.msra.mxu0 0
    %533 = vmatprep.subr.bf16.mxu0 0
    %534 = vmatpush1.bf16.msra.mxu0 0
    %535 = vmatprep.subr.bf16.mxu0 0
    %536 = vmatpush1.bf16.msra.mxu0 0
    %537 = vmatprep.subr.bf16.mxu0 0
    %538 = vmatpush1.bf16.msra.mxu0 0
    %539 = vmatprep.subr.bf16.mxu0 0
    %540 = vmatpush1.bf16.msra.mxu0 0
    %541 = vmatprep.subr.bf16.mxu0 0
    %542 = vmatpush1.bf16.msra.mxu0 0
    %543 = vmatprep.subr.bf16.mxu0 0
    %544 = vmatpush1.bf16.msra.mxu0 0
    %545 = vmatprep.mubr.bf16.mxu0 0
    %546 = vmatmul.mubr.bf16.gmra.mrb[0].mxu0 %v306
    %v547 = vpop.f32.mrb[0].mxu0
    %v548 = vadd.f32 %v107, %v547
    %v549 = vpop.f32.mrb[0].mxu0
    %v550 = vadd.f32 %v111, %v549
    %v551 = vpop.f32.mrb[0].mxu0
    %v552 = vpop.f32.mrb[0].mxu0
    %553 = vdwg.mxu0
    %554 = vmatprep.subr.bf16.mxu0 %v253
    %555 = vmatpush1.bf16.msra.mxu0 %v252
    %556 = vmatprep.subr.bf16.mxu0 %v269
    %557 = vmatpush1.bf16.msra.mxu0 %v268
    %558 = vmatprep.subr.bf16.mxu0 0
    %559 = vmatpush1.bf16.msra.mxu0 0
    %560 = vmatprep.subr.bf16.mxu0 0
    %561 = vmatpush1.bf16.msra.mxu0 0
    %562 = vmatprep.subr.bf16.mxu0 0
    %563 = vmatpush1.bf16.msra.mxu0 0
    %564 = vmatprep.subr.bf16.mxu0 0
    %565 = vmatpush1.bf16.msra.mxu0 0
    %566 = vmatprep.subr.bf16.mxu0 0
    %567 = vmatpush1.bf16.msra.mxu0 0
    %568 = vmatprep.subr.bf16.mxu0 0
    %569 = vmatpush1.bf16.msra.mxu0 0
    %570 = vmatprep.subr.bf16.mxu0 0
    %571 = vmatpush1.bf16.msra.mxu0 0
    %572 = vmatprep.subr.bf16.mxu0 0
    %573 = vmatpush1.bf16.msra.mxu0 0
    %574 = vmatprep.subr.bf16.mxu0 0
    %575 = vmatpush1.bf16.msra.mxu0 0
    %576 = vmatprep.subr.bf16.mxu0 0
    %577 = vmatpush1.bf16.msra.mxu0 0
    %578 = vmatprep.subr.bf16.mxu0 0
    %579 = vmatpush1.bf16.msra.mxu0 0
    %580 = vmatprep.subr.bf16.mxu0 0
    %581 = vmatpush1.bf16.msra.mxu0 0
    %582 = vmatprep.subr.bf16.mxu0 0
    %583 = vmatpush1.bf16.msra.mxu0 0
    %584 = vmatprep.subr.bf16.mxu0 0
    %585 = vmatpush1.bf16.msra.mxu0 0
    %586 = vmatprep.mubr.bf16.mxu0 0
    %587 = vmatmul.mubr.bf16.gmra.mrb[0].mxu0 %v306
    %v588 = vpop.f32.mrb[0].mxu0
    %v589 = vadd.f32 %v115, %v588
    %v590 = vpop.f32.mrb[0].mxu0
    %v591 = vadd.f32 %v119, %v590
    %v592 = vpop.f32.mrb[0].mxu0
    %v593 = vpop.f32.mrb[0].mxu0
    %594 = vdwg.mxu0
    %595 = vmatprep.subr.bf16.mxu0 %v255
    %596 = vmatpush1.bf16.msra.mxu0 %v254
    %597 = vmatprep.subr.bf16.mxu0 %v271
    %598 = vmatpush1.bf16.msra.mxu0 %v270
    %599 = vmatprep.subr.bf16.mxu0 0
    %600 = vmatpush1.bf16.msra.mxu0 0
    %601 = vmatprep.subr.bf16.mxu0 0
    %602 = vmatpush1.bf16.msra.mxu0 0
    %603 = vmatprep.subr.bf16.mxu0 0
    %604 = vmatpush1.bf16.msra.mxu0 0
    %605 = vmatprep.subr.bf16.mxu0 0
    %606 = vmatpush1.bf16.msra.mxu0 0
    %607 = vmatprep.subr.bf16.mxu0 0
    %608 = vmatpush1.bf16.msra.mxu0 0
    %609 = vmatprep.subr.bf16.mxu0 0
    %610 = vmatpush1.bf16.msra.mxu0 0
    %611 = vmatprep.subr.bf16.mxu0 0
    %612 = vmatpush1.bf16.msra.mxu0 0
    %613 = vmatprep.subr.bf16.mxu0 0
    %614 = vmatpush1.bf16.msra.mxu0 0
    %615 = vmatprep.subr.bf16.mxu0 0
    %616 = vmatpush1.bf16.msra.mxu0 0
    %617 = vmatprep.subr.bf16.mxu0 0
    %618 = vmatpush1.bf16.msra.mxu0 0
    %619 = vmatprep.subr.bf16.mxu0 0
    %620 = vmatpush1.bf16.msra.mxu0 0
    %621 = vmatprep.subr.bf16.mxu0 0
    %622 = vmatpush1.bf16.msra.mxu0 0
    %623 = vmatprep.subr.bf16.mxu0 0
    %624 = vmatpush1.bf16.msra.mxu0 0
    %625 = vmatprep.subr.bf16.mxu0 0
    %626 = vmatpush1.bf16.msra.mxu0 0
    %627 = vmatprep.mubr.bf16.mxu0 0
    %628 = vmatmul.mubr.bf16.gmra.mrb[0].mxu0 %v306
    %v629 = vpop.f32.mrb[0].mxu0
    %v630 = vadd.f32 %v123, %v629
    %v631 = vpop.f32.mrb[0].mxu0
    %v632 = vadd.f32 %v127, %v631
    %v633 = vpop.f32.mrb[0].mxu0
    %v634 = vpop.f32.mrb[0].mxu0
    %635 = vdwg.mxu0
    %v636 = vmax.f32 %v343, 0.0
    %v637 = vmax.f32 %v345, 0.0
    %v638 = vmax.f32 %v384, 0.0
    %v639 = vmax.f32 %v386, 0.0
    %v640 = vmax.f32 %v425, 0.0
    %v641 = vmax.f32 %v427, 0.0
    %v642 = vmax.f32 %v466, 0.0
    %v643 = vmax.f32 %v468, 0.0
    %v644 = vmax.f32 %v507, 0.0
    %v645 = vmax.f32 %v509, 0.0
    %v646 = vmax.f32 %v548, 0.0
    %v647 = vmax.f32 %v550, 0.0
    %v648 = vmax.f32 %v589, 0.0
    %v649 = vmax.f32 %v591, 0.0
    %v650 = vmax.f32 %v630, 0.0
    %v651 = vmax.f32 %v632, 0.0
    %v652 = vld [vmem:[#allocation2] sm:$0xff]
    %v653 = vpack.c.bf16 %v636, %v636
    %v654 = vpack.c.bf16 %v637, %v637
    %v655 = vpack.c.bf16 %v638, %v638
    %v656 = vpack.c.bf16 %v639, %v639
    %v657 = vpack.c.bf16 %v640, %v640
    %v658 = vpack.c.bf16 %v641, %v641
    %v659 = vpack.c.bf16 %v642, %v642
    %v660 = vpack.c.bf16 %v643, %v643
    %v661 = vpack.c.bf16 %v644, %v644
    %v662 = vpack.c.bf16 %v645, %v645
    %v663 = vpack.c.bf16 %v646, %v646
    %v664 = vpack.c.bf16 %v647, %v647
    %v665 = vpack.c.bf16 %v648, %v648
    %v666 = vpack.c.bf16 %v649, %v649
    %v667 = vpack.c.bf16 %v650, %v650
    %v668 = vpack.c.bf16 %v651, %v651
    %v669 = vld [vmem:[%s3] sm:$0xf]
    %v670 = vld [vmem:[%s3 + $0x4] sm:$0xf]
    %v671 = vld [vmem:[%s3 + $0x8] sm:$0xf]
    %v672 = vld [vmem:[%s3 + $0xc] sm:$0xf]
    %v673 = vld [vmem:[%s3 + $0x10] sm:$0xf]
    %v674 = vld [vmem:[%s3 + $0x14] sm:$0xf]
    %v675 = vld [vmem:[%s3 + $0x18] sm:$0xf]
    %v676 = vld [vmem:[%s3 + $0x1c] sm:$0xf]
    %v677 = vld [vmem:[%s3 + $0x20] sm:$0xf]
    %v678 = vld [vmem:[%s3 + $0x24] sm:$0xf]
    %v679 = vld [vmem:[%s3 + $0x28] sm:$0xf]
    %v680 = vld [vmem:[%s3 + $0x2c] sm:$0xf]
    %v681 = vld [vmem:[%s3 + $0x30] sm:$0xf]
    %v682 = vld [vmem:[%s3 + $0x34] sm:$0xf]
    %v683 = vld [vmem:[%s3 + $0x38] sm:$0xf]
    %v684 = vld [vmem:[%s3 + $0x3c] sm:$0xf]
    %v685 = vld [vmem:[%s3 + $0x40] sm:$0xf]
    %v686 = vld [vmem:[%s3 + $0x44] sm:$0xf]
    %v687 = vld [vmem:[%s3 + $0x48] sm:$0xf]
    %v688 = vld [vmem:[%s3 + $0x4c] sm:$0xf]
    %v689 = vld [vmem:[%s3 + $0x50] sm:$0xf]
    %v690 = vld [vmem:[%s3 + $0x54] sm:$0xf]
    %v691 = vld [vmem:[%s3 + $0x58] sm:$0xf]
    %v692 = vld [vmem:[%s3 + $0x5c] sm:$0xf]
    %v693 = vld [vmem:[%s3 + $0x60] sm:$0xf]
    %v694 = vld [vmem:[%s3 + $0x64] sm:$0xf]
    %v695 = vld [vmem:[%s3 + $0x68] sm:$0xf]
    %v696 = vld [vmem:[%s3 + $0x6c] sm:$0xf]
    %v697 = vld [vmem:[%s3 + $0x70] sm:$0xf]
    %v698 = vld [vmem:[%s3 + $0x74] sm:$0xf]
    %v699 = vld [vmem:[%s3 + $0x78] sm:$0xf]
    %v700 = vld [vmem:[%s3 + $0x7c] sm:$0xf]
    %v701 = vld [vmem:[%s3 + $0x80] sm:$0xf]
    %v702 = vld [vmem:[%s3 + $0x84] sm:$0xf]
    %v703 = vld [vmem:[%s3 + $0x88] sm:$0xf]
    %v704 = vld [vmem:[%s3 + $0x8c] sm:$0xf]
    %v705 = vld [vmem:[%s3 + $0x90] sm:$0xf]
    %v706 = vld [vmem:[%s3 + $0x94] sm:$0xf]
    %v707 = vld [vmem:[%s3 + $0x98] sm:$0xf]
    %v708 = vld [vmem:[%s3 + $0x9c] sm:$0xf]
    %v709 = vld [vmem:[%s3 + $0xa0] sm:$0xf]
    %v710 = vld [vmem:[%s3 + $0xa4] sm:$0xf]
    %v711 = vld [vmem:[%s3 + $0xa8] sm:$0xf]
    %v712 = vld [vmem:[%s3 + $0xac] sm:$0xf]
    %v713 = vld [vmem:[%s3 + $0xb0] sm:$0xf]
    %v714 = vld [vmem:[%s3 + $0xb4] sm:$0xf]
    %v715 = vld [vmem:[%s3 + $0xb8] sm:$0xf]
    %v716 = vld [vmem:[%s3 + $0xbc] sm:$0xf]
    %v717 = vld [vmem:[%s3 + $0xc0] sm:$0xf]
    %v718 = vld [vmem:[%s3 + $0xc4] sm:$0xf]
    %v719 = vld [vmem:[%s3 + $0xc8] sm:$0xf]
    %v720 = vld [vmem:[%s3 + $0xcc] sm:$0xf]
    %v721 = vld [vmem:[%s3 + $0xd0] sm:$0xf]
    %v722 = vld [vmem:[%s3 + $0xd4] sm:$0xf]
    %v723 = vld [vmem:[%s3 + $0xd8] sm:$0xf]
    %v724 = vld [vmem:[%s3 + $0xdc] sm:$0xf]
    %v725 = vld [vmem:[%s3 + $0xe0] sm:$0xf]
    %v726 = vld [vmem:[%s3 + $0xe4] sm:$0xf]
    %v727 = vld [vmem:[%s3 + $0xe8] sm:$0xf]
    %v728 = vld [vmem:[%s3 + $0xec] sm:$0xf]
    %v729 = vld [vmem:[%s3 + $0xf0] sm:$0xf]
    %v730 = vld [vmem:[%s3 + $0xf4] sm:$0xf]
    %v731 = vld [vmem:[%s3 + $0xf8] sm:$0xf]
    %v732 = vld [vmem:[%s3 + $0xfc] sm:$0xf]
    %v733 = vld [vmem:[%s3 + $0x100] sm:$0xf]
    %v734 = vld [vmem:[%s3 + $0x104] sm:$0xf]
    %v735 = vld [vmem:[%s3 + $0x108] sm:$0xf]
    %v736 = vld [vmem:[%s3 + $0x10c] sm:$0xf]
    %v737 = vld [vmem:[%s3 + $0x110] sm:$0xf]
    %v738 = vld [vmem:[%s3 + $0x114] sm:$0xf]
    %v739 = vld [vmem:[%s3 + $0x118] sm:$0xf]
    %v740 = vld [vmem:[%s3 + $0x11c] sm:$0xf]
    %v741 = vld [vmem:[%s3 + $0x120] sm:$0xf]
    %v742 = vld [vmem:[%s3 + $0x124] sm:$0xf]
    %v743 = vld [vmem:[%s3 + $0x128] sm:$0xf]
    %v744 = vld [vmem:[%s3 + $0x12c] sm:$0xf]
    %v745 = vld [vmem:[%s3 + $0x130] sm:$0xf]
    %v746 = vld [vmem:[%s3 + $0x134] sm:$0xf]
    %v747 = vld [vmem:[%s3 + $0x138] sm:$0xf]
    %v748 = vld [vmem:[%s3 + $0x13c] sm:$0xf]
    %v749 = vld [vmem:[%s3 + $0x140] sm:$0xf]
    %v750 = vld [vmem:[%s3 + $0x144] sm:$0xf]
    %v751 = vld [vmem:[%s3 + $0x148] sm:$0xf]
    %v752 = vld [vmem:[%s3 + $0x14c] sm:$0xf]
    %v753 = vld [vmem:[%s3 + $0x150] sm:$0xf]
    %v754 = vld [vmem:[%s3 + $0x154] sm:$0xf]
    %v755 = vld [vmem:[%s3 + $0x158] sm:$0xf]
    %v756 = vld [vmem:[%s3 + $0x15c] sm:$0xf]
    %v757 = vld [vmem:[%s3 + $0x160] sm:$0xf]
    %v758 = vld [vmem:[%s3 + $0x164] sm:$0xf]
    %v759 = vld [vmem:[%s3 + $0x168] sm:$0xf]
    %v760 = vld [vmem:[%s3 + $0x16c] sm:$0xf]
    %v761 = vld [vmem:[%s3 + $0x170] sm:$0xf]
    %v762 = vld [vmem:[%s3 + $0x174] sm:$0xf]
    %v763 = vld [vmem:[%s3 + $0x178] sm:$0xf]
    %v764 = vld [vmem:[%s3 + $0x17c] sm:$0xf]
    %v765 = vld [vmem:[%s3 + $0x180] sm:$0xf]
    %v766 = vld [vmem:[%s3 + $0x184] sm:$0xf]
    %v767 = vld [vmem:[%s3 + $0x188] sm:$0xf]
    %v768 = vld [vmem:[%s3 + $0x18c] sm:$0xf]
    %v769 = vld [vmem:[%s3 + $0x190] sm:$0xf]
    %v770 = vld [vmem:[%s3 + $0x194] sm:$0xf]
    %v771 = vld [vmem:[%s3 + $0x198] sm:$0xf]
    %v772 = vld [vmem:[%s3 + $0x19c] sm:$0xf]
    %v773 = vld [vmem:[%s3 + $0x1a0] sm:$0xf]
    %v774 = vld [vmem:[%s3 + $0x1a4] sm:$0xf]
    %v775 = vld [vmem:[%s3 + $0x1a8] sm:$0xf]
    %v776 = vld [vmem:[%s3 + $0x1ac] sm:$0xf]
    %v777 = vld [vmem:[%s3 + $0x1b0] sm:$0xf]
    %v778 = vld [vmem:[%s3 + $0x1b4] sm:$0xf]
    %v779 = vld [vmem:[%s3 + $0x1b8] sm:$0xf]
    %v780 = vld [vmem:[%s3 + $0x1bc] sm:$0xf]
    %v781 = vld [vmem:[%s3 + $0x1c0] sm:$0xf]
    %v782 = vld [vmem:[%s3 + $0x1c4] sm:$0xf]
    %v783 = vld [vmem:[%s3 + $0x1c8] sm:$0xf]
    %v784 = vld [vmem:[%s3 + $0x1cc] sm:$0xf]
    %v785 = vld [vmem:[%s3 + $0x1d0] sm:$0xf]
    %v786 = vld [vmem:[%s3 + $0x1d4] sm:$0xf]
    %v787 = vld [vmem:[%s3 + $0x1d8] sm:$0xf]
    %v788 = vld [vmem:[%s3 + $0x1dc] sm:$0xf]
    %v789 = vld [vmem:[%s3 + $0x1e0] sm:$0xf]
    %v790 = vld [vmem:[%s3 + $0x1e4] sm:$0xf]
    %v791 = vld [vmem:[%s3 + $0x1e8] sm:$0xf]
    %v792 = vld [vmem:[%s3 + $0x1ec] sm:$0xf]
    %v793 = vld [vmem:[%s3 + $0x1f0] sm:$0xf]
    %v794 = vld [vmem:[%s3 + $0x1f4] sm:$0xf]
    %v795 = vld [vmem:[%s3 + $0x1f8] sm:$0xf]
    %v796 = vld [vmem:[%s3 + $0x1fc] sm:$0xf]
    %v797 = vld [vmem:[%s3 + $0x200] sm:$0xf]
    %v798 = vld [vmem:[%s3 + $0x204] sm:$0xf]
    %v799 = vld [vmem:[%s3 + $0x208] sm:$0xf]
    %v800 = vld [vmem:[%s3 + $0x20c] sm:$0xf]
    %v801 = vld [vmem:[%s3 + $0x210] sm:$0xf]
    %v802 = vld [vmem:[%s3 + $0x214] sm:$0xf]
    %v803 = vld [vmem:[%s3 + $0x218] sm:$0xf]
    %v804 = vld [vmem:[%s3 + $0x21c] sm:$0xf]
    %v805 = vld [vmem:[%s3 + $0x220] sm:$0xf]
    %v806 = vld [vmem:[%s3 + $0x224] sm:$0xf]
    %v807 = vld [vmem:[%s3 + $0x228] sm:$0xf]
    %v808 = vld [vmem:[%s3 + $0x22c] sm:$0xf]
    %v809 = vld [vmem:[%s3 + $0x230] sm:$0xf]
    %v810 = vld [vmem:[%s3 + $0x234] sm:$0xf]
    %v811 = vld [vmem:[%s3 + $0x238] sm:$0xf]
    %v812 = vld [vmem:[%s3 + $0x23c] sm:$0xf]
    %v813 = vld [vmem:[%s3 + $0x240] sm:$0xf]
    %v814 = vld [vmem:[%s3 + $0x244] sm:$0xf]
    %v815 = vld [vmem:[%s3 + $0x248] sm:$0xf]
    %v816 = vld [vmem:[%s3 + $0x24c] sm:$0xf]
    %v817 = vld [vmem:[%s3 + $0x250] sm:$0xf]
    %v818 = vld [vmem:[%s3 + $0x254] sm:$0xf]
    %v819 = vld [vmem:[%s3 + $0x258] sm:$0xf]
    %v820 = vld [vmem:[%s3 + $0x25c] sm:$0xf]
    %v821 = vld [vmem:[%s3 + $0x260] sm:$0xf]
    %v822 = vld [vmem:[%s3 + $0x264] sm:$0xf]
    %v823 = vld [vmem:[%s3 + $0x268] sm:$0xf]
    %v824 = vld [vmem:[%s3 + $0x26c] sm:$0xf]
    %v825 = vld [vmem:[%s3 + $0x270] sm:$0xf]
    %v826 = vld [vmem:[%s3 + $0x274] sm:$0xf]
    %v827 = vld [vmem:[%s3 + $0x278] sm:$0xf]
    %v828 = vld [vmem:[%s3 + $0x27c] sm:$0xf]
    %v829 = vld [vmem:[%s3 + $0x280] sm:$0xf]
    %v830 = vld [vmem:[%s3 + $0x284] sm:$0xf]
    %v831 = vld [vmem:[%s3 + $0x288] sm:$0xf]
    %v832 = vld [vmem:[%s3 + $0x28c] sm:$0xf]
    %v833 = vld [vmem:[%s3 + $0x290] sm:$0xf]
    %v834 = vld [vmem:[%s3 + $0x294] sm:$0xf]
    %v835 = vld [vmem:[%s3 + $0x298] sm:$0xf]
    %v836 = vld [vmem:[%s3 + $0x29c] sm:$0xf]
    %v837 = vld [vmem:[%s3 + $0x2a0] sm:$0xf]
    %v838 = vld [vmem:[%s3 + $0x2a4] sm:$0xf]
    %v839 = vld [vmem:[%s3 + $0x2a8] sm:$0xf]
    %v840 = vld [vmem:[%s3 + $0x2ac] sm:$0xf]
    %v841 = vld [vmem:[%s3 + $0x2b0] sm:$0xf]
    %v842 = vld [vmem:[%s3 + $0x2b4] sm:$0xf]
    %v843 = vld [vmem:[%s3 + $0x2b8] sm:$0xf]
    %v844 = vld [vmem:[%s3 + $0x2bc] sm:$0xf]
    %v845 = vld [vmem:[%s3 + $0x2c0] sm:$0xf]
    %v846 = vld [vmem:[%s3 + $0x2c4] sm:$0xf]
    %v847 = vld [vmem:[%s3 + $0x2c8] sm:$0xf]
    %v848 = vld [vmem:[%s3 + $0x2cc] sm:$0xf]
    %v849 = vld [vmem:[%s3 + $0x2d0] sm:$0xf]
    %v850 = vld [vmem:[%s3 + $0x2d4] sm:$0xf]
    %v851 = vld [vmem:[%s3 + $0x2d8] sm:$0xf]
    %v852 = vld [vmem:[%s3 + $0x2dc] sm:$0xf]
    %v853 = vld [vmem:[%s3 + $0x2e0] sm:$0xf]
    %v854 = vld [vmem:[%s3 + $0x2e4] sm:$0xf]
    %v855 = vld [vmem:[%s3 + $0x2e8] sm:$0xf]
    %v856 = vld [vmem:[%s3 + $0x2ec] sm:$0xf]
    %v857 = vld [vmem:[%s3 + $0x2f0] sm:$0xf]
    %v858 = vld [vmem:[%s3 + $0x2f4] sm:$0xf]
    %v859 = vld [vmem:[%s3 + $0x2f8] sm:$0xf]
    %v860 = vld [vmem:[%s3 + $0x2fc] sm:$0xf]
    %v861 = vld [vmem:[%s3 + $0x300] sm:$0xf]
    %v862 = vld [vmem:[%s3 + $0x304] sm:$0xf]
    %v863 = vld [vmem:[%s3 + $0x308] sm:$0xf]
    %v864 = vld [vmem:[%s3 + $0x30c] sm:$0xf]
    %v865 = vld [vmem:[%s3 + $0x310] sm:$0xf]
    %v866 = vld [vmem:[%s3 + $0x314] sm:$0xf]
    %v867 = vld [vmem:[%s3 + $0x318] sm:$0xf]
    %v868 = vld [vmem:[%s3 + $0x31c] sm:$0xf]
    %v869 = vld [vmem:[%s3 + $0x320] sm:$0xf]
    %v870 = vld [vmem:[%s3 + $0x324] sm:$0xf]
    %v871 = vld [vmem:[%s3 + $0x328] sm:$0xf]
    %v872 = vld [vmem:[%s3 + $0x32c] sm:$0xf]
    %v873 = vld [vmem:[%s3 + $0x330] sm:$0xf]
    %v874 = vld [vmem:[%s3 + $0x334] sm:$0xf]
    %v875 = vld [vmem:[%s3 + $0x338] sm:$0xf]
    %v876 = vld [vmem:[%s3 + $0x33c] sm:$0xf]
    %v877 = vld [vmem:[%s3 + $0x340] sm:$0xf]
    %v878 = vld [vmem:[%s3 + $0x344] sm:$0xf]
    %v879 = vld [vmem:[%s3 + $0x348] sm:$0xf]
    %v880 = vld [vmem:[%s3 + $0x34c] sm:$0xf]
    %v881 = vld [vmem:[%s3 + $0x350] sm:$0xf]
    %v882 = vld [vmem:[%s3 + $0x354] sm:$0xf]
    %v883 = vld [vmem:[%s3 + $0x358] sm:$0xf]
    %v884 = vld [vmem:[%s3 + $0x35c] sm:$0xf]
    %v885 = vld [vmem:[%s3 + $0x360] sm:$0xf]
    %v886 = vld [vmem:[%s3 + $0x364] sm:$0xf]
    %v887 = vld [vmem:[%s3 + $0x368] sm:$0xf]
    %v888 = vld [vmem:[%s3 + $0x36c] sm:$0xf]
    %v889 = vld [vmem:[%s3 + $0x370] sm:$0xf]
    %v890 = vld [vmem:[%s3 + $0x374] sm:$0xf]
    %v891 = vld [vmem:[%s3 + $0x378] sm:$0xf]
    %v892 = vld [vmem:[%s3 + $0x37c] sm:$0xf]
    %v893 = vld [vmem:[%s3 + $0x380] sm:$0xf]
    %v894 = vld [vmem:[%s3 + $0x384] sm:$0xf]
    %v895 = vld [vmem:[%s3 + $0x388] sm:$0xf]
    %v896 = vld [vmem:[%s3 + $0x38c] sm:$0xf]
    %v897 = vld [vmem:[%s3 + $0x390] sm:$0xf]
    %v898 = vld [vmem:[%s3 + $0x394] sm:$0xf]
    %v899 = vld [vmem:[%s3 + $0x398] sm:$0xf]
    %v900 = vld [vmem:[%s3 + $0x39c] sm:$0xf]
    %v901 = vld [vmem:[%s3 + $0x3a0] sm:$0xf]
    %v902 = vld [vmem:[%s3 + $0x3a4] sm:$0xf]
    %v903 = vld [vmem:[%s3 + $0x3a8] sm:$0xf]
    %v904 = vld [vmem:[%s3 + $0x3ac] sm:$0xf]
    %v905 = vld [vmem:[%s3 + $0x3b0] sm:$0xf]
    %v906 = vld [vmem:[%s3 + $0x3b4] sm:$0xf]
    %v907 = vld [vmem:[%s3 + $0x3b8] sm:$0xf]
    %v908 = vld [vmem:[%s3 + $0x3bc] sm:$0xf]
    %v909 = vld [vmem:[%s3 + $0x3c0] sm:$0xf]
    %v910 = vld [vmem:[%s3 + $0x3c4] sm:$0xf]
    %v911 = vld [vmem:[%s3 + $0x3c8] sm:$0xf]
    %v912 = vld [vmem:[%s3 + $0x3cc] sm:$0xf]
    %v913 = vld [vmem:[%s3 + $0x3d0] sm:$0xf]
    %v914 = vld [vmem:[%s3 + $0x3d4] sm:$0xf]
    %v915 = vld [vmem:[%s3 + $0x3d8] sm:$0xf]
    %v916 = vld [vmem:[%s3 + $0x3dc] sm:$0xf]
    %v917 = vld [vmem:[%s3 + $0x3e0] sm:$0xf]
    %v918 = vld [vmem:[%s3 + $0x3e4] sm:$0xf]
    %v919 = vld [vmem:[%s3 + $0x3e8] sm:$0xf]
    %v920 = vld [vmem:[%s3 + $0x3ec] sm:$0xf]
    %v921 = vld [vmem:[%s3 + $0x3f0] sm:$0xf]
    %v922 = vld [vmem:[%s3 + $0x3f4] sm:$0xf]
    %v923 = vld [vmem:[%s3 + $0x3f8] sm:$0xf]
    %v924 = vld [vmem:[%s3 + $0x3fc] sm:$0xf]
    %v1181 = vunpack.c.l.b16 %v669
    %v1182 = vunpack.c.l.b16 %v670
    %v1183 = vunpack.c.l.b16 %v671
    %v1184 = vunpack.c.l.b16 %v672
    %v1185 = vunpack.c.l.b16 %v673
    %v1186 = vunpack.c.l.b16 %v674
    %v1187 = vunpack.c.l.b16 %v675
    %v1188 = vunpack.c.l.b16 %v676
    %v1189 = vunpack.c.l.b16 %v677
    %v1190 = vunpack.c.l.b16 %v678
    %v1191 = vunpack.c.l.b16 %v679
    %v1192 = vunpack.c.l.b16 %v680
    %v1193 = vunpack.c.l.b16 %v681
    %v1194 = vunpack.c.l.b16 %v682
    %v1195 = vunpack.c.l.b16 %v683
    %v1196 = vunpack.c.l.b16 %v684
    %v1197 = vunpack.c.l.b16 %v685
    %v1198 = vunpack.c.l.b16 %v686
    %v1199 = vunpack.c.l.b16 %v687
    %v1200 = vunpack.c.l.b16 %v688
    %v1201 = vunpack.c.l.b16 %v689
    %v1202 = vunpack.c.l.b16 %v690
    %v1203 = vunpack.c.l.b16 %v691
    %v1204 = vunpack.c.l.b16 %v692
    %v1205 = vunpack.c.l.b16 %v693
    %v1206 = vunpack.c.l.b16 %v694
    %v1207 = vunpack.c.l.b16 %v695
    %v1208 = vunpack.c.l.b16 %v696
    %v1209 = vunpack.c.l.b16 %v697
    %v1210 = vunpack.c.l.b16 %v698
    %v1211 = vunpack.c.l.b16 %v699
    %v1212 = vunpack.c.l.b16 %v700
    %v1213 = vunpack.c.l.b16 %v701
    %v1214 = vunpack.c.l.b16 %v702
    %v1215 = vunpack.c.l.b16 %v703
    %v1216 = vunpack.c.l.b16 %v704
    %v1217 = vunpack.c.l.b16 %v705
    %v1218 = vunpack.c.l.b16 %v706
    %v1219 = vunpack.c.l.b16 %v707
    %v1220 = vunpack.c.l.b16 %v708
    %v1221 = vunpack.c.l.b16 %v709
    %v1222 = vunpack.c.l.b16 %v710
    %v1223 = vunpack.c.l.b16 %v711
    %v1224 = vunpack.c.l.b16 %v712
    %v1225 = vunpack.c.l.b16 %v713
    %v1226 = vunpack.c.l.b16 %v714
    %v1227 = vunpack.c.l.b16 %v715
    %v1228 = vunpack.c.l.b16 %v716
    %v1229 = vunpack.c.l.b16 %v717
    %v1230 = vunpack.c.l.b16 %v718
    %v1231 = vunpack.c.l.b16 %v719
    %v1232 = vunpack.c.l.b16 %v720
    %v1233 = vunpack.c.l.b16 %v721
    %v1234 = vunpack.c.l.b16 %v722
    %v1235 = vunpack.c.l.b16 %v723
    %v1236 = vunpack.c.l.b16 %v724
    %v1237 = vunpack.c.l.b16 %v725
    %v1238 = vunpack.c.l.b16 %v726
    %v1239 = vunpack.c.l.b16 %v727
    %v1240 = vunpack.c.l.b16 %v728
    %v1241 = vunpack.c.l.b16 %v729
    %v1242 = vunpack.c.l.b16 %v730
    %v1243 = vunpack.c.l.b16 %v731
    %v1244 = vunpack.c.l.b16 %v732
    %v1245 = vunpack.c.l.b16 %v733
    %v1246 = vunpack.c.l.b16 %v734
    %v1247 = vunpack.c.l.b16 %v735
    %v1248 = vunpack.c.l.b16 %v736
    %v1249 = vunpack.c.l.b16 %v737
    %v1250 = vunpack.c.l.b16 %v738
    %v1251 = vunpack.c.l.b16 %v739
    %v1252 = vunpack.c.l.b16 %v740
    %v1253 = vunpack.c.l.b16 %v741
    %v1254 = vunpack.c.l.b16 %v742
    %v1255 = vunpack.c.l.b16 %v743
    %v1256 = vunpack.c.l.b16 %v744
    %v1257 = vunpack.c.l.b16 %v745
    %v1258 = vunpack.c.l.b16 %v746
    %v1259 = vunpack.c.l.b16 %v747
    %v1260 = vunpack.c.l.b16 %v748
    %v1261 = vunpack.c.l.b16 %v749
    %v1262 = vunpack.c.l.b16 %v750
    %v1263 = vunpack.c.l.b16 %v751
    %v1264 = vunpack.c.l.b16 %v752
    %v1265 = vunpack.c.l.b16 %v753
    %v1266 = vunpack.c.l.b16 %v754
    %v1267 = vunpack.c.l.b16 %v755
    %v1268 = vunpack.c.l.b16 %v756
    %v1269 = vunpack.c.l.b16 %v757
    %v1270 = vunpack.c.l.b16 %v758
    %v1271 = vunpack.c.l.b16 %v759
    %v1272 = vunpack.c.l.b16 %v760
    %v1273 = vunpack.c.l.b16 %v761
    %v1274 = vunpack.c.l.b16 %v762
    %v1275 = vunpack.c.l.b16 %v763
    %v1276 = vunpack.c.l.b16 %v764
    %v1277 = vunpack.c.l.b16 %v765
    %v1278 = vunpack.c.l.b16 %v766
    %v1279 = vunpack.c.l.b16 %v767
    %v1280 = vunpack.c.l.b16 %v768
    %v1281 = vunpack.c.l.b16 %v769
    %v1282 = vunpack.c.l.b16 %v770
    %v1283 = vunpack.c.l.b16 %v771
    %v1284 = vunpack.c.l.b16 %v772
    %v1285 = vunpack.c.l.b16 %v773
    %v1286 = vunpack.c.l.b16 %v774
    %v1287 = vunpack.c.l.b16 %v775
    %v1288 = vunpack.c.l.b16 %v776
    %v1289 = vunpack.c.l.b16 %v777
    %v1290 = vunpack.c.l.b16 %v778
    %v1291 = vunpack.c.l.b16 %v779
    %v1292 = vunpack.c.l.b16 %v780
    %v1293 = vunpack.c.l.b16 %v781
    %v1294 = vunpack.c.l.b16 %v782
    %v1295 = vunpack.c.l.b16 %v783
    %v1296 = vunpack.c.l.b16 %v784
    %v1297 = vunpack.c.l.b16 %v785
    %v1298 = vunpack.c.l.b16 %v786
    %v1299 = vunpack.c.l.b16 %v787
    %v1300 = vunpack.c.l.b16 %v788
    %v1301 = vunpack.c.l.b16 %v789
    %v1302 = vunpack.c.l.b16 %v790
    %v1303 = vunpack.c.l.b16 %v791
    %v1304 = vunpack.c.l.b16 %v792
    %v1305 = vunpack.c.l.b16 %v793
    %v1306 = vunpack.c.l.b16 %v794
    %v1307 = vunpack.c.l.b16 %v795
    %v1308 = vunpack.c.l.b16 %v796
    %v1309 = vunpack.c.l.b16 %v797
    %v1310 = vunpack.c.l.b16 %v798
    %v1311 = vunpack.c.l.b16 %v799
    %v1312 = vunpack.c.l.b16 %v800
    %v1313 = vunpack.c.l.b16 %v801
    %v1314 = vunpack.c.l.b16 %v802
    %v1315 = vunpack.c.l.b16 %v803
    %v1316 = vunpack.c.l.b16 %v804
    %v1317 = vunpack.c.l.b16 %v805
    %v1318 = vunpack.c.l.b16 %v806
    %v1319 = vunpack.c.l.b16 %v807
    %v1320 = vunpack.c.l.b16 %v808
    %v1321 = vunpack.c.l.b16 %v809
    %v1322 = vunpack.c.l.b16 %v810
    %v1323 = vunpack.c.l.b16 %v811
    %v1324 = vunpack.c.l.b16 %v812
    %v1325 = vunpack.c.l.b16 %v813
    %v1326 = vunpack.c.l.b16 %v814
    %v1327 = vunpack.c.l.b16 %v815
    %v1328 = vunpack.c.l.b16 %v816
    %v1329 = vunpack.c.l.b16 %v817
    %v1330 = vunpack.c.l.b16 %v818
    %v1331 = vunpack.c.l.b16 %v819
    %v1332 = vunpack.c.l.b16 %v820
    %v1333 = vunpack.c.l.b16 %v821
    %v1334 = vunpack.c.l.b16 %v822
    %v1335 = vunpack.c.l.b16 %v823
    %v1336 = vunpack.c.l.b16 %v824
    %v1337 = vunpack.c.l.b16 %v825
    %v1338 = vunpack.c.l.b16 %v826
    %v1339 = vunpack.c.l.b16 %v827
    %v1340 = vunpack.c.l.b16 %v828
    %v1341 = vunpack.c.l.b16 %v829
    %v1342 = vunpack.c.l.b16 %v830
    %v1343 = vunpack.c.l.b16 %v831
    %v1344 = vunpack.c.l.b16 %v832
    %v1345 = vunpack.c.l.b16 %v833
    %v1346 = vunpack.c.l.b16 %v834
    %v1347 = vunpack.c.l.b16 %v835
    %v1348 = vunpack.c.l.b16 %v836
    %v1349 = vunpack.c.l.b16 %v837
    %v1350 = vunpack.c.l.b16 %v838
    %v1351 = vunpack.c.l.b16 %v839
    %v1352 = vunpack.c.l.b16 %v840
    %v1353 = vunpack.c.l.b16 %v841
    %v1354 = vunpack.c.l.b16 %v842
    %v1355 = vunpack.c.l.b16 %v843
    %v1356 = vunpack.c.l.b16 %v844
    %v1357 = vunpack.c.l.b16 %v845
    %v1358 = vunpack.c.l.b16 %v846
    %v1359 = vunpack.c.l.b16 %v847
    %v1360 = vunpack.c.l.b16 %v848
    %v1361 = vunpack.c.l.b16 %v849
    %v1362 = vunpack.c.l.b16 %v850
    %v1363 = vunpack.c.l.b16 %v851
    %v1364 = vunpack.c.l.b16 %v852
    %v1365 = vunpack.c.l.b16 %v853
    %v1366 = vunpack.c.l.b16 %v854
    %v1367 = vunpack.c.l.b16 %v855
    %v1368 = vunpack.c.l.b16 %v856
    %v1369 = vunpack.c.l.b16 %v857
    %v1370 = vunpack.c.l.b16 %v858
    %v1371 = vunpack.c.l.b16 %v859
    %v1372 = vunpack.c.l.b16 %v860
    %v1373 = vunpack.c.l.b16 %v861
    %v1374 = vunpack.c.l.b16 %v862
    %v1375 = vunpack.c.l.b16 %v863
    %v1376 = vunpack.c.l.b16 %v864
    %v1377 = vunpack.c.l.b16 %v865
    %v1378 = vunpack.c.l.b16 %v866
    %v1379 = vunpack.c.l.b16 %v867
    %v1380 = vunpack.c.l.b16 %v868
    %v1381 = vunpack.c.l.b16 %v869
    %v1382 = vunpack.c.l.b16 %v870
    %v1383 = vunpack.c.l.b16 %v871
    %v1384 = vunpack.c.l.b16 %v872
    %v1385 = vunpack.c.l.b16 %v873
    %v1386 = vunpack.c.l.b16 %v874
    %v1387 = vunpack.c.l.b16 %v875
    %v1388 = vunpack.c.l.b16 %v876
    %v1389 = vunpack.c.l.b16 %v877
    %v1390 = vunpack.c.l.b16 %v878
    %v1391 = vunpack.c.l.b16 %v879
    %v1392 = vunpack.c.l.b16 %v880
    %v1393 = vunpack.c.l.b16 %v881
    %v1394 = vunpack.c.l.b16 %v882
    %v1395 = vunpack.c.l.b16 %v883
    %v1396 = vunpack.c.l.b16 %v884
    %v1397 = vunpack.c.l.b16 %v885
    %v1398 = vunpack.c.l.b16 %v886
    %v1399 = vunpack.c.l.b16 %v887
    %v1400 = vunpack.c.l.b16 %v888
    %v1401 = vunpack.c.l.b16 %v889
    %v1402 = vunpack.c.l.b16 %v890
    %v1403 = vunpack.c.l.b16 %v891
    %v1404 = vunpack.c.l.b16 %v892
    %v1405 = vunpack.c.l.b16 %v893
    %v1406 = vunpack.c.l.b16 %v894
    %v1407 = vunpack.c.l.b16 %v895
    %v1408 = vunpack.c.l.b16 %v896
    %v1409 = vunpack.c.l.b16 %v897
    %v1410 = vunpack.c.l.b16 %v898
    %v1411 = vunpack.c.l.b16 %v899
    %v1412 = vunpack.c.l.b16 %v900
    %v1413 = vunpack.c.l.b16 %v901
    %v1414 = vunpack.c.l.b16 %v902
    %v1415 = vunpack.c.l.b16 %v903
    %v1416 = vunpack.c.l.b16 %v904
    %v1417 = vunpack.c.l.b16 %v905
    %v1418 = vunpack.c.l.b16 %v906
    %v1419 = vunpack.c.l.b16 %v907
    %v1420 = vunpack.c.l.b16 %v908
    %v1421 = vunpack.c.l.b16 %v909
    %v1422 = vunpack.c.l.b16 %v910
    %v1423 = vunpack.c.l.b16 %v911
    %v1424 = vunpack.c.l.b16 %v912
    %v1425 = vunpack.c.l.b16 %v913
    %v1426 = vunpack.c.l.b16 %v914
    %v1427 = vunpack.c.l.b16 %v915
    %v1428 = vunpack.c.l.b16 %v916
    %v1429 = vunpack.c.l.b16 %v917
    %v1430 = vunpack.c.l.b16 %v918
    %v1431 = vunpack.c.l.b16 %v919
    %v1432 = vunpack.c.l.b16 %v920
    %v1433 = vunpack.c.l.b16 %v921
    %v1434 = vunpack.c.l.b16 %v922
    %v1435 = vunpack.c.l.b16 %v923
    %v1436 = vunpack.c.l.b16 %v924
    %v1437 = vpack.c.b16 %v1182, %v1181
    %v1438 = vpack.c.b16 %v1184, %v1183
    %v1439 = vpack.c.b16 %v1186, %v1185
    %v1440 = vpack.c.b16 %v1188, %v1187
    %v1441 = vpack.c.b16 %v1190, %v1189
    %v1442 = vpack.c.b16 %v1192, %v1191
    %v1443 = vpack.c.b16 %v1194, %v1193
    %v1444 = vpack.c.b16 %v1196, %v1195
    %v1445 = vpack.c.b16 %v1198, %v1197
    %v1446 = vpack.c.b16 %v1200, %v1199
    %v1447 = vpack.c.b16 %v1202, %v1201
    %v1448 = vpack.c.b16 %v1204, %v1203
    %v1449 = vpack.c.b16 %v1206, %v1205
    %v1450 = vpack.c.b16 %v1208, %v1207
    %v1451 = vpack.c.b16 %v1210, %v1209
    %v1452 = vpack.c.b16 %v1212, %v1211
    %v1453 = vpack.c.b16 %v1214, %v1213
    %v1454 = vpack.c.b16 %v1216, %v1215
    %v1455 = vpack.c.b16 %v1218, %v1217
    %v1456 = vpack.c.b16 %v1220, %v1219
    %v1457 = vpack.c.b16 %v1222, %v1221
    %v1458 = vpack.c.b16 %v1224, %v1223
    %v1459 = vpack.c.b16 %v1226, %v1225
    %v1460 = vpack.c.b16 %v1228, %v1227
    %v1461 = vpack.c.b16 %v1230, %v1229
    %v1462 = vpack.c.b16 %v1232, %v1231
    %v1463 = vpack.c.b16 %v1234, %v1233
    %v1464 = vpack.c.b16 %v1236, %v1235
    %v1465 = vpack.c.b16 %v1238, %v1237
    %v1466 = vpack.c.b16 %v1240, %v1239
    %v1467 = vpack.c.b16 %v1242, %v1241
    %v1468 = vpack.c.b16 %v1244, %v1243
    %v1469 = vpack.c.b16 %v1246, %v1245
    %v1470 = vpack.c.b16 %v1248, %v1247
    %v1471 = vpack.c.b16 %v1250, %v1249
    %v1472 = vpack.c.b16 %v1252, %v1251
    %v1473 = vpack.c.b16 %v1254, %v1253
    %v1474 = vpack.c.b16 %v1256, %v1255
    %v1475 = vpack.c.b16 %v1258, %v1257
    %v1476 = vpack.c.b16 %v1260, %v1259
    %v1477 = vpack.c.b16 %v1262, %v1261
    %v1478 = vpack.c.b16 %v1264, %v1263
    %v1479 = vpack.c.b16 %v1266, %v1265
    %v1480 = vpack.c.b16 %v1268, %v1267
    %v1481 = vpack.c.b16 %v1270, %v1269
    %v1482 = vpack.c.b16 %v1272, %v1271
    %v1483 = vpack.c.b16 %v1274, %v1273
    %v1484 = vpack.c.b16 %v1276, %v1275
    %v1485 = vpack.c.b16 %v1278, %v1277
    %v1486 = vpack.c.b16 %v1280, %v1279
    %v1487 = vpack.c.b16 %v1282, %v1281
    %v1488 = vpack.c.b16 %v1284, %v1283
    %v1489 = vpack.c.b16 %v1286, %v1285
    %v1490 = vpack.c.b16 %v1288, %v1287
    %v1491 = vpack.c.b16 %v1290, %v1289
    %v1492 = vpack.c.b16 %v1292, %v1291
    %v1493 = vpack.c.b16 %v1294, %v1293
    %v1494 = vpack.c.b16 %v1296, %v1295
    %v1495 = vpack.c.b16 %v1298, %v1297
    %v1496 = vpack.c.b16 %v1300, %v1299
    %v1497 = vpack.c.b16 %v1302, %v1301
    %v1498 = vpack.c.b16 %v1304, %v1303
    %v1499 = vpack.c.b16 %v1306, %v1305
    %v1500 = vpack.c.b16 %v1308, %v1307
    %v1501 = vpack.c.b16 %v1310, %v1309
    %v1502 = vpack.c.b16 %v1312, %v1311
    %v1503 = vpack.c.b16 %v1314, %v1313
    %v1504 = vpack.c.b16 %v1316, %v1315
    %v1505 = vpack.c.b16 %v1318, %v1317
    %v1506 = vpack.c.b16 %v1320, %v1319
    %v1507 = vpack.c.b16 %v1322, %v1321
    %v1508 = vpack.c.b16 %v1324, %v1323
    %v1509 = vpack.c.b16 %v1326, %v1325
    %v1510 = vpack.c.b16 %v1328, %v1327
    %v1511 = vpack.c.b16 %v1330, %v1329
    %v1512 = vpack.c.b16 %v1332, %v1331
    %v1513 = vpack.c.b16 %v1334, %v1333
    %v1514 = vpack.c.b16 %v1336, %v1335
    %v1515 = vpack.c.b16 %v1338, %v1337
    %v1516 = vpack.c.b16 %v1340, %v1339
    %v1517 = vpack.c.b16 %v1342, %v1341
    %v1518 = vpack.c.b16 %v1344, %v1343
    %v1519 = vpack.c.b16 %v1346, %v1345
    %v1520 = vpack.c.b16 %v1348, %v1347
    %v1521 = vpack.c.b16 %v1350, %v1349
    %v1522 = vpack.c.b16 %v1352, %v1351
    %v1523 = vpack.c.b16 %v1354, %v1353
    %v1524 = vpack.c.b16 %v1356, %v1355
    %v1525 = vpack.c.b16 %v1358, %v1357
    %v1526 = vpack.c.b16 %v1360, %v1359
    %v1527 = vpack.c.b16 %v1362, %v1361
    %v1528 = vpack.c.b16 %v1364, %v1363
    %v1529 = vpack.c.b16 %v1366, %v1365
    %v1530 = vpack.c.b16 %v1368, %v1367
    %v1531 = vpack.c.b16 %v1370, %v1369
    %v1532 = vpack.c.b16 %v1372, %v1371
    %v1533 = vpack.c.b16 %v1374, %v1373
    %v1534 = vpack.c.b16 %v1376, %v1375
    %v1535 = vpack.c.b16 %v1378, %v1377
    %v1536 = vpack.c.b16 %v1380, %v1379
    %v1537 = vpack.c.b16 %v1382, %v1381
    %v1538 = vpack.c.b16 %v1384, %v1383
    %v1539 = vpack.c.b16 %v1386, %v1385
    %v1540 = vpack.c.b16 %v1388, %v1387
    %v1541 = vpack.c.b16 %v1390, %v1389
    %v1542 = vpack.c.b16 %v1392, %v1391
    %v1543 = vpack.c.b16 %v1394, %v1393
    %v1544 = vpack.c.b16 %v1396, %v1395
    %v1545 = vpack.c.b16 %v1398, %v1397
    %v1546 = vpack.c.b16 %v1400, %v1399
    %v1547 = vpack.c.b16 %v1402, %v1401
    %v1548 = vpack.c.b16 %v1404, %v1403
    %v1549 = vpack.c.b16 %v1406, %v1405
    %v1550 = vpack.c.b16 %v1408, %v1407
    %v1551 = vpack.c.b16 %v1410, %v1409
    %v1552 = vpack.c.b16 %v1412, %v1411
    %v1553 = vpack.c.b16 %v1414, %v1413
    %v1554 = vpack.c.b16 %v1416, %v1415
    %v1555 = vpack.c.b16 %v1418, %v1417
    %v1556 = vpack.c.b16 %v1420, %v1419
    %v1557 = vpack.c.b16 %v1422, %v1421
    %v1558 = vpack.c.b16 %v1424, %v1423
    %v1559 = vpack.c.b16 %v1426, %v1425
    %v1560 = vpack.c.b16 %v1428, %v1427
    %v1561 = vpack.c.b16 %v1430, %v1429
    %v1562 = vpack.c.b16 %v1432, %v1431
    %v1563 = vpack.c.b16 %v1434, %v1433
    %v1564 = vpack.c.b16 %v1436, %v1435
    %1693 = vmatprep.subr.bf16.mxu0 0
    %1694 = vmatpush1.bf16.msra.mxu0 %v1437
    %1695 = vmatprep.subr.bf16.mxu0 0
    %1696 = vmatpush1.bf16.msra.mxu0 %v1438
    %1697 = vmatprep.subr.bf16.mxu0 0
    %1698 = vmatpush1.bf16.msra.mxu0 %v1439
    %1699 = vmatprep.subr.bf16.mxu0 0
    %1700 = vmatpush1.bf16.msra.mxu0 %v1440
    %1701 = vmatprep.subr.bf16.mxu0 0
    %1702 = vmatpush1.bf16.msra.mxu0 %v1441
    %1703 = vmatprep.subr.bf16.mxu0 0
    %1704 = vmatpush1.bf16.msra.mxu0 %v1442
    %1705 = vmatprep.subr.bf16.mxu0 0
    %1706 = vmatpush1.bf16.msra.mxu0 %v1443
    %1707 = vmatprep.subr.bf16.mxu0 0
    %1708 = vmatpush1.bf16.msra.mxu0 %v1444
    %1709 = vmatprep.subr.bf16.mxu0 0
    %1710 = vmatpush1.bf16.msra.mxu0 %v1445
    %1711 = vmatprep.subr.bf16.mxu0 0
    %1712 = vmatpush1.bf16.msra.mxu0 %v1446
    %1713 = vmatprep.subr.bf16.mxu0 0
    %1714 = vmatpush1.bf16.msra.mxu0 %v1447
    %1715 = vmatprep.subr.bf16.mxu0 0
    %1716 = vmatpush1.bf16.msra.mxu0 %v1448
    %1717 = vmatprep.subr.bf16.mxu0 0
    %1718 = vmatpush1.bf16.msra.mxu0 %v1449
    %1719 = vmatprep.subr.bf16.mxu0 0
    %1720 = vmatpush1.bf16.msra.mxu0 %v1450
    %1721 = vmatprep.subr.bf16.mxu0 0
    %1722 = vmatpush1.bf16.msra.mxu0 %v1451
    %1723 = vmatprep.subr.bf16.mxu0 0
    %1724 = vmatpush1.bf16.msra.mxu0 %v1452
    %1725 = vmatprep.mubr.bf16.mxu0 %v654
    %1726 = vmatmul.mubr.bf16.gmra.mrb[0].mxu0 %v653
    %v1727 = vpop.f32.mrb[0].mxu0
    %v1728 = vadd.f32 0.0, %v1727
    %v1729 = vpop.f32.mrb[0].mxu0
    %v1730 = vpop.f32.mrb[0].mxu0
    %v1731 = vpop.f32.mrb[0].mxu0
    %1732 = vdwg.mxu0
    %1733 = vmatprep.subr.bf16.mxu0 0
    %1734 = vmatpush1.bf16.msra.mxu0 %v1453
    %1735 = vmatprep.subr.bf16.mxu0 0
    %1736 = vmatpush1.bf16.msra.mxu0 %v1454
    %1737 = vmatprep.subr.bf16.mxu0 0
    %1738 = vmatpush1.bf16.msra.mxu0 %v1455
    %1739 = vmatprep.subr.bf16.mxu0 0
    %1740 = vmatpush1.bf16.msra.mxu0 %v1456
    %1741 = vmatprep.subr.bf16.mxu0 0
    %1742 = vmatpush1.bf16.msra.mxu0 %v1457
    %1743 = vmatprep.subr.bf16.mxu0 0
    %1744 = vmatpush1.bf16.msra.mxu0 %v1458
    %1745 = vmatprep.subr.bf16.mxu0 0
    %1746 = vmatpush1.bf16.msra.mxu0 %v1459
    %1747 = vmatprep.subr.bf16.mxu0 0
    %1748 = vmatpush1.bf16.msra.mxu0 %v1460
    %1749 = vmatprep.subr.bf16.mxu0 0
    %1750 = vmatpush1.bf16.msra.mxu0 %v1461
    %1751 = vmatprep.subr.bf16.mxu0 0
    %1752 = vmatpush1.bf16.msra.mxu0 %v1462
    %1753 = vmatprep.subr.bf16.mxu0 0
    %1754 = vmatpush1.bf16.msra.mxu0 %v1463
    %1755 = vmatprep.subr.bf16.mxu0 0
    %1756 = vmatpush1.bf16.msra.mxu0 %v1464
    %1757 = vmatprep.subr.bf16.mxu0 0
    %1758 = vmatpush1.bf16.msra.mxu0 %v1465
    %1759 = vmatprep.subr.bf16.mxu0 0
    %1760 = vmatpush1.bf16.msra.mxu0 %v1466
    %1761 = vmatprep.subr.bf16.mxu0 0
    %1762 = vmatpush1.bf16.msra.mxu0 %v1467
    %1763 = vmatprep.subr.bf16.mxu0 0
    %1764 = vmatpush1.bf16.msra.mxu0 %v1468
    %1765 = vmatprep.mubr.bf16.mxu0 %v656
    %1766 = vmatmul.mubr.bf16.gmra.mrb[0].mxu0 %v655
    %v1767 = vpop.f32.mrb[0].mxu0
    %v1768 = vadd.f32 %v1728, %v1767
    %v1769 = vpop.f32.mrb[0].mxu0
    %v1770 = vpop.f32.mrb[0].mxu0
    %v1771 = vpop.f32.mrb[0].mxu0
    %1772 = vdwg.mxu0
    %1773 = vmatprep.subr.bf16.mxu0 0
    %1774 = vmatpush1.bf16.msra.mxu0 %v1469
    %1775 = vmatprep.subr.bf16.mxu0 0
    %1776 = vmatpush1.bf16.msra.mxu0 %v1470
    %1777 = vmatprep.subr.bf16.mxu0 0
    %1778 = vmatpush1.bf16.msra.mxu0 %v1471
    %1779 = vmatprep.subr.bf16.mxu0 0
    %1780 = vmatpush1.bf16.msra.mxu0 %v1472
    %1781 = vmatprep.subr.bf16.mxu0 0
    %1782 = vmatpush1.bf16.msra.mxu0 %v1473
    %1783 = vmatprep.subr.bf16.mxu0 0
    %1784 = vmatpush1.bf16.msra.mxu0 %v1474
    %1785 = vmatprep.subr.bf16.mxu0 0
    %1786 = vmatpush1.bf16.msra.mxu0 %v1475
    %1787 = vmatprep.subr.bf16.mxu0 0
    %1788 = vmatpush1.bf16.msra.mxu0 %v1476
    %1789 = vmatprep.subr.bf16.mxu0 0
    %1790 = vmatpush1.bf16.msra.mxu0 %v1477
    %1791 = vmatprep.subr.bf16.mxu0 0
    %1792 = vmatpush1.bf16.msra.mxu0 %v1478
    %1793 = vmatprep.subr.bf16.mxu0 0
    %1794 = vmatpush1.bf16.msra.mxu0 %v1479
    %1795 = vmatprep.subr.bf16.mxu0 0
    %1796 = vmatpush1.bf16.msra.mxu0 %v1480
    %1797 = vmatprep.subr.bf16.mxu0 0
    %1798 = vmatpush1.bf16.msra.mxu0 %v1481
    %1799 = vmatprep.subr.bf16.mxu0 0
    %1800 = vmatpush1.bf16.msra.mxu0 %v1482
    %1801 = vmatprep.subr.bf16.mxu0 0
    %1802 = vmatpush1.bf16.msra.mxu0 %v1483
    %1803 = vmatprep.subr.bf16.mxu0 0
    %1804 = vmatpush1.bf16.msra.mxu0 %v1484
    %1805 = vmatprep.mubr.bf16.mxu0 %v658
    %1806 = vmatmul.mubr.bf16.gmra.mrb[0].mxu0 %v657
    %v1807 = vpop.f32.mrb[0].mxu0
    %v1808 = vadd.f32 %v1768, %v1807
    %v1809 = vpop.f32.mrb[0].mxu0
    %v1810 = vpop.f32.mrb[0].mxu0
    %v1811 = vpop.f32.mrb[0].mxu0
    %1812 = vdwg.mxu0
    %1813 = vmatprep.subr.bf16.mxu0 0
    %1814 = vmatpush1.bf16.msra.mxu0 %v1485
    %1815 = vmatprep.subr.bf16.mxu0 0
    %1816 = vmatpush1.bf16.msra.mxu0 %v1486
    %1817 = vmatprep.subr.bf16.mxu0 0
    %1818 = vmatpush1.bf16.msra.mxu0 %v1487
    %1819 = vmatprep.subr.bf16.mxu0 0
    %1820 = vmatpush1.bf16.msra.mxu0 %v1488
    %1821 = vmatprep.subr.bf16.mxu0 0
    %1822 = vmatpush1.bf16.msra.mxu0 %v1489
    %1823 = vmatprep.subr.bf16.mxu0 0
    %1824 = vmatpush1.bf16.msra.mxu0 %v1490
    %1825 = vmatprep.subr.bf16.mxu0 0
    %1826 = vmatpush1.bf16.msra.mxu0 %v1491
    %1827 = vmatprep.subr.bf16.mxu0 0
    %1828 = vmatpush1.bf16.msra.mxu0 %v1492
    %1829 = vmatprep.subr.bf16.mxu0 0
    %1830 = vmatpush1.bf16.msra.mxu0 %v1493
    %1831 = vmatprep.subr.bf16.mxu0 0
    %1832 = vmatpush1.bf16.msra.mxu0 %v1494
    %1833 = vmatprep.subr.bf16.mxu0 0
    %1834 = vmatpush1.bf16.msra.mxu0 %v1495
    %1835 = vmatprep.subr.bf16.mxu0 0
    %1836 = vmatpush1.bf16.msra.mxu0 %v1496
    %1837 = vmatprep.subr.bf16.mxu0 0
    %1838 = vmatpush1.bf16.msra.mxu0 %v1497
    %1839 = vmatprep.subr.bf16.mxu0 0
    %1840 = vmatpush1.bf16.msra.mxu0 %v1498
    %1841 = vmatprep.subr.bf16.mxu0 0
    %1842 = vmatpush1.bf16.msra.mxu0 %v1499
    %1843 = vmatprep.subr.bf16.mxu0 0
    %1844 = vmatpush1.bf16.msra.mxu0 %v1500
    %1845 = vmatprep.mubr.bf16.mxu0 %v660
    %1846 = vmatmul.mubr.bf16.gmra.mrb[0].mxu0 %v659
    %v1847 = vpop.f32.mrb[0].mxu0
    %v1848 = vadd.f32 %v1808, %v1847
    %v1849 = vpop.f32.mrb[0].mxu0
    %v1850 = vpop.f32.mrb[0].mxu0
    %v1851 = vpop.f32.mrb[0].mxu0
    %1852 = vdwg.mxu0
    %1853 = vmatprep.subr.bf16.mxu0 0
    %1854 = vmatpush1.bf16.msra.mxu0 %v1501
    %1855 = vmatprep.subr.bf16.mxu0 0
    %1856 = vmatpush1.bf16.msra.mxu0 %v1502
    %1857 = vmatprep.subr.bf16.mxu0 0
    %1858 = vmatpush1.bf16.msra.mxu0 %v1503
    %1859 = vmatprep.subr.bf16.mxu0 0
    %1860 = vmatpush1.bf16.msra.mxu0 %v1504
    %1861 = vmatprep.subr.bf16.mxu0 0
    %1862 = vmatpush1.bf16.msra.mxu0 %v1505
    %1863 = vmatprep.subr.bf16.mxu0 0
    %1864 = vmatpush1.bf16.msra.mxu0 %v1506
    %1865 = vmatprep.subr.bf16.mxu0 0
    %1866 = vmatpush1.bf16.msra.mxu0 %v1507
    %1867 = vmatprep.subr.bf16.mxu0 0
    %1868 = vmatpush1.bf16.msra.mxu0 %v1508
    %1869 = vmatprep.subr.bf16.mxu0 0
    %1870 = vmatpush1.bf16.msra.mxu0 %v1509
    %1871 = vmatprep.subr.bf16.mxu0 0
    %1872 = vmatpush1.bf16.msra.mxu0 %v1510
    %1873 = vmatprep.subr.bf16.mxu0 0
    %1874 = vmatpush1.bf16.msra.mxu0 %v1511
    %1875 = vmatprep.subr.bf16.mxu0 0
    %1876 = vmatpush1.bf16.msra.mxu0 %v1512
    %1877 = vmatprep.subr.bf16.mxu0 0
    %1878 = vmatpush1.bf16.msra.mxu0 %v1513
    %1879 = vmatprep.subr.bf16.mxu0 0
    %1880 = vmatpush1.bf16.msra.mxu0 %v1514
    %1881 = vmatprep.subr.bf16.mxu0 0
    %1882 = vmatpush1.bf16.msra.mxu0 %v1515
    %1883 = vmatprep.subr.bf16.mxu0 0
    %1884 = vmatpush1.bf16.msra.mxu0 %v1516
    %1885 = vmatprep.mubr.bf16.mxu0 %v662
    %1886 = vmatmul.mubr.bf16.gmra.mrb[0].mxu0 %v661
    %v1887 = vpop.f32.mrb[0].mxu0
    %v1888 = vadd.f32 %v1848, %v1887
    %v1889 = vpop.f32.mrb[0].mxu0
    %v1890 = vpop.f32.mrb[0].mxu0
    %v1891 = vpop.f32.mrb[0].mxu0
    %1892 = vdwg.mxu0
    %1893 = vmatprep.subr.bf16.mxu0 0
    %1894 = vmatpush1.bf16.msra.mxu0 %v1517
    %1895 = vmatprep.subr.bf16.mxu0 0
    %1896 = vmatpush1.bf16.msra.mxu0 %v1518
    %1897 = vmatprep.subr.bf16.mxu0 0
    %1898 = vmatpush1.bf16.msra.mxu0 %v1519
    %1899 = vmatprep.subr.bf16.mxu0 0
    %1900 = vmatpush1.bf16.msra.mxu0 %v1520
    %1901 = vmatprep.subr.bf16.mxu0 0
    %1902 = vmatpush1.bf16.msra.mxu0 %v1521
    %1903 = vmatprep.subr.bf16.mxu0 0
    %1904 = vmatpush1.bf16.msra.mxu0 %v1522
    %1905 = vmatprep.subr.bf16.mxu0 0
    %1906 = vmatpush1.bf16.msra.mxu0 %v1523
    %1907 = vmatprep.subr.bf16.mxu0 0
    %1908 = vmatpush1.bf16.msra.mxu0 %v1524
    %1909 = vmatprep.subr.bf16.mxu0 0
    %1910 = vmatpush1.bf16.msra.mxu0 %v1525
    %1911 = vmatprep.subr.bf16.mxu0 0
    %1912 = vmatpush1.bf16.msra.mxu0 %v1526
    %1913 = vmatprep.subr.bf16.mxu0 0
    %1914 = vmatpush1.bf16.msra.mxu0 %v1527
    %1915 = vmatprep.subr.bf16.mxu0 0
    %1916 = vmatpush1.bf16.msra.mxu0 %v1528
    %1917 = vmatprep.subr.bf16.mxu0 0
    %1918 = vmatpush1.bf16.msra.mxu0 %v1529
    %1919 = vmatprep.subr.bf16.mxu0 0
    %1920 = vmatpush1.bf16.msra.mxu0 %v1530
    %1921 = vmatprep.subr.bf16.mxu0 0
    %1922 = vmatpush1.bf16.msra.mxu0 %v1531
    %1923 = vmatprep.subr.bf16.mxu0 0
    %1924 = vmatpush1.bf16.msra.mxu0 %v1532
    %1925 = vmatprep.mubr.bf16.mxu0 %v664
    %1926 = vmatmul.mubr.bf16.gmra.mrb[0].mxu0 %v663
    %v1927 = vpop.f32.mrb[0].mxu0
    %v1928 = vadd.f32 %v1888, %v1927
    %v1929 = vpop.f32.mrb[0].mxu0
    %v1930 = vpop.f32.mrb[0].mxu0
    %v1931 = vpop.f32.mrb[0].mxu0
    %1932 = vdwg.mxu0
    %1933 = vmatprep.subr.bf16.mxu0 0
    %1934 = vmatpush1.bf16.msra.mxu0 %v1533
    %1935 = vmatprep.subr.bf16.mxu0 0
    %1936 = vmatpush1.bf16.msra.mxu0 %v1534
    %1937 = vmatprep.subr.bf16.mxu0 0
    %1938 = vmatpush1.bf16.msra.mxu0 %v1535
    %1939 = vmatprep.subr.bf16.mxu0 0
    %1940 = vmatpush1.bf16.msra.mxu0 %v1536
    %1941 = vmatprep.subr.bf16.mxu0 0
    %1942 = vmatpush1.bf16.msra.mxu0 %v1537
    %1943 = vmatprep.subr.bf16.mxu0 0
    %1944 = vmatpush1.bf16.msra.mxu0 %v1538
    %1945 = vmatprep.subr.bf16.mxu0 0
    %1946 = vmatpush1.bf16.msra.mxu0 %v1539
    %1947 = vmatprep.subr.bf16.mxu0 0
    %1948 = vmatpush1.bf16.msra.mxu0 %v1540
    %1949 = vmatprep.subr.bf16.mxu0 0
    %1950 = vmatpush1.bf16.msra.mxu0 %v1541
    %1951 = vmatprep.subr.bf16.mxu0 0
    %1952 = vmatpush1.bf16.msra.mxu0 %v1542
    %1953 = vmatprep.subr.bf16.mxu0 0
    %1954 = vmatpush1.bf16.msra.mxu0 %v1543
    %1955 = vmatprep.subr.bf16.mxu0 0
    %1956 = vmatpush1.bf16.msra.mxu0 %v1544
    %1957 = vmatprep.subr.bf16.mxu0 0
    %1958 = vmatpush1.bf16.msra.mxu0 %v1545
    %1959 = vmatprep.subr.bf16.mxu0 0
    %1960 = vmatpush1.bf16.msra.mxu0 %v1546
    %1961 = vmatprep.subr.bf16.mxu0 0
    %1962 = vmatpush1.bf16.msra.mxu0 %v1547
    %1963 = vmatprep.subr.bf16.mxu0 0
    %1964 = vmatpush1.bf16.msra.mxu0 %v1548
    %1965 = vmatprep.mubr.bf16.mxu0 %v666
    %1966 = vmatmul.mubr.bf16.gmra.mrb[0].mxu0 %v665
    %v1967 = vpop.f32.mrb[0].mxu0
    %v1968 = vadd.f32 %v1928, %v1967
    %v1969 = vpop.f32.mrb[0].mxu0
    %v1970 = vpop.f32.mrb[0].mxu0
    %v1971 = vpop.f32.mrb[0].mxu0
    %1972 = vdwg.mxu0
    %1973 = vmatprep.subr.bf16.mxu0 0
    %1974 = vmatpush1.bf16.msra.mxu0 %v1549
    %1975 = vmatprep.subr.bf16.mxu0 0
    %1976 = vmatpush1.bf16.msra.mxu0 %v1550
    %1977 = vmatprep.subr.bf16.mxu0 0
    %1978 = vmatpush1.bf16.msra.mxu0 %v1551
    %1979 = vmatprep.subr.bf16.mxu0 0
    %1980 = vmatpush1.bf16.msra.mxu0 %v1552
    %1981 = vmatprep.subr.bf16.mxu0 0
    %1982 = vmatpush1.bf16.msra.mxu0 %v1553
    %1983 = vmatprep.subr.bf16.mxu0 0
    %1984 = vmatpush1.bf16.msra.mxu0 %v1554
    %1985 = vmatprep.subr.bf16.mxu0 0
    %1986 = vmatpush1.bf16.msra.mxu0 %v1555
    %1987 = vmatprep.subr.bf16.mxu0 0
    %1988 = vmatpush1.bf16.msra.mxu0 %v1556
    %1989 = vmatprep.subr.bf16.mxu0 0
    %1990 = vmatpush1.bf16.msra.mxu0 %v1557
    %1991 = vmatprep.subr.bf16.mxu0 0
    %1992 = vmatpush1.bf16.msra.mxu0 %v1558
    %1993 = vmatprep.subr.bf16.mxu0 0
    %1994 = vmatpush1.bf16.msra.mxu0 %v1559
    %1995 = vmatprep.subr.bf16.mxu0 0
    %1996 = vmatpush1.bf16.msra.mxu0 %v1560
    %1997 = vmatprep.subr.bf16.mxu0 0
    %1998 = vmatpush1.bf16.msra.mxu0 %v1561
    %1999 = vmatprep.subr.bf16.mxu0 0
    %2000 = vmatpush1.bf16.msra.mxu0 %v1562
    %2001 = vmatprep.subr.bf16.mxu0 0
    %2002 = vmatpush1.bf16.msra.mxu0 %v1563
    %2003 = vmatprep.subr.bf16.mxu0 0
    %2004 = vmatpush1.bf16.msra.mxu0 %v1564
    %2005 = vmatprep.mubr.bf16.mxu0 %v668
    %2006 = vmatmul.mubr.bf16.gmra.mrb[0].mxu0 %v667
    %v2007 = vpop.f32.mrb[0].mxu0
    %v2008 = vadd.f32 %v1968, %v2007
    %v2009 = vpop.f32.mrb[0].mxu0
    %v2010 = vpop.f32.mrb[0].mxu0
    %v2011 = vpop.f32.mrb[0].mxu0
    %2012 = vdwg.mxu0
    %v2013 = vadd.f32 %v652, %v2008
    %2014 = vst [vmem:[#allocation2] sm:$0xff] %v2013
    // Predicated region
    $region26: #{proj_head_mini.1} parent=1 // pred_check
      %p2015 = pneg %p22
    $region27: #{proj_head_mini.1} parent=1 // pred_check_branch
      %2017 = sbr.rel (%p2015) target = $region29
    $region28: #{proj_head_mini.1} parent=1 // pred_region
      %v2018 = vld [vmem:[#allocation2] sm:$0xff]
      %v2019 = vld [vmem:[%s4] sm:$0x1]
      %v2021 = vlaneseq
      %v2022 = vshrl.u32 %v2021, 7
      %v2023 = vsub.s32 0, %v2022
      %v2024 = vrot.slane %v2019, %v2023
      %v2026 = vadd.f32 %v2018, %v2024
      %v2027 = vmul.f32 %v2026, %v2026
      %2028 = vadd.xlane.f32.xlu0 %v2027
      %v2029 = vpop.xlane.xlu0 %2028
      %v2030 = vmax.f32 %v2029, 1e-24
      %v2031 = vrsqrt.pop %v2030
      %v2032 = vmul.f32 %v2026, %v2031
      %2033 = vst [vmem:[#allocation2] sm:$0xff] %v2032
    $region29: #{proj_head_mini.1} parent=1 // pred_fallthru
      _
    // Predicated region
    $region30: #{proj_head_mini.1} parent=1 // pred_check
      _
    $region31: #{proj_head_mini.1} parent=1 // pred_check_branch
      %2035 = sbr.rel (0) target = $region33
    $region32: #{proj_head_mini.1} parent=1 // pred_region
      %s2037 = ssub.s32 128, 128
      %2038 = vsyncadd [#allocation3], %s2037
      %s2040 = sshll.u32 [#allocation2], 4
      %s2041 = int_to_ptr.vmem [resolvable:$true] %s2040
      %2043 = dma.vmem_to_hbm [thread:$0]  %s2041, 128, %s5, [#allocation3]
    $region33: #{proj_head_mini.1} parent=1 // pred_fallthru
      _
    // Predicated region
    $region34: #{proj_head_mini.1} parent=1 // pred_check
      _
    $region35: #{proj_head_mini.1} parent=1 // pred_check_branch
      %2045 = sbr.rel (0) target = $region37
    $region36: #{proj_head_mini.1} parent=1 // pred_region
      %2046 = dma.done [#allocation3], 128
    $region37: #{proj_head_mini.1} parent=1 // pred_fallthru
      _
    %2047 = vsyncpa [#allocation3], 1

</llo_original>
